<compile_context>
chip_gen: v7x
topology: tpu7x:2x2x1
jax: 0.10.0
libtpu: 0.0.40
codegen_flags: <defaults>
</compile_context>

<pallas_src>
import functools

import jax
import jax.numpy as jnp
from jax.experimental import pallas as pl
from jax.experimental.pallas import tpu as pltpu

H = 64            # hid_feat of Sequence and hidden width of Gate
_W2_OFF = 80      # row offset of the fused lstm2 weight inside the packed bf16 block


def gate_sequence_kernel(factor_ref, w_rec_ref, w_gate_ref, w_row_ref, out_ref, *, n_his):
    T = n_his + 1

    x = factor_ref[...]                     # (bb, T) f32
    B = x.shape[0]
    x_bf = x.astype(jnp.bfloat16)

    # ---- packed bf16 MXU weights (gate columns pre-permuted to [i, f, o, g]) ----
    w_rec = w_rec_ref[...]                  # (_W2_OFF + 2H, 4H) bf16
    w1 = w_rec[0:H + 2, :]                  # (H+2, 4H)  [whh1; wih1; b1]  (bias driven by a 1-col)
    w2 = w_rec[_W2_OFF:_W2_OFF + 2 * H, :]  # (2H,  4H)  [wih2; whh2]      (fused input+recurrence)

    w_gate = w_gate_ref[...]                # (rows, 128) bf16, lane-dense gate MLP weights
    gw1 = w_gate[0:T, 0:H]                  # (T, 64)   layer1 (BN1 folded)
    gw2 = w_gate[0:H, H:2 * H]              # (64, 64)  layer2 (BN2 folded)

    # ---- packed f32 rows / scalars ----
    w_row = w_row_ref[...]                  # (8, 4H) f32
    b2 = w_row[0:1, :]                      # (1, 4H)
    wl = w_row[1:2, 0:2 * H]                # (1, 2H)  output-linear weights for [h1, h2]
    wlx = w_row[1:2, 2 * H:2 * H + 1]       # (1, 1)   output-linear weight for x
    bl = w_row[2:3, 0:1]                    # (1, 1)
    gb3 = w_row[2:3, 1:2]                   # (1, 1)
    gb1 = w_row[3:4, 0:H]                   # (1, 64)
    gb2 = w_row[4:5, 0:H]                   # (1, 64)
    gw3 = w_row[5:6, 0:H]                   # (1, 64)

    ones_col = jnp.ones((B, 1), jnp.bfloat16)   # drives the folded cell1 bias row (hoisted)

    h1 = jnp.zeros((B, H), jnp.float32)
    c1 = jnp.zeros((B, H), jnp.float32)
    h2 = jnp.zeros((B, H), jnp.float32)
    c2 = jnp.zeros((B, H), jnp.float32)

    def sigmoid(z):
        # single-EUP sigmoid: sigmoid(z) == 0.5 * (1 + tanh(z/2))
        return 0.5 * (jnp.tanh(0.5 * z) + 1.0)

    def activate(gates):
        # columns pre-permuted to [i, f, o, g]: one sigmoid over 3H, one tanh over H.
        s = sigmoid(gates[:, 0:3 * H])
        gg = jnp.tanh(gates[:, 3 * H:4 * H])
        return s[:, 0:H], s[:, H:2 * H], s[:, 2 * H:3 * H], gg

    def cell1(x_t, h, c):
        # input term + bias folded into one K=H+2 MXU matmul.
        lhs = jnp.concatenate(
            [h.astype(jnp.bfloat16), x_t.astype(jnp.bfloat16), ones_col], axis=1)  # (B, H+2)
        gates = jnp.dot(lhs, w1, preferred_element_type=jnp.float32)
        i, f, o, gg = activate(gates)
        c = f * c + i * gg
        return o * jnp.tanh(c), c

    def cell2(h1_new, h, c):
        # fused K=2H matmul: input contribution + recurrence in one MXU op.
        lhs = jnp.concatenate([h1_new, h], axis=1).astype(jnp.bfloat16)             # (B, 2H)
        gates = jnp.dot(lhs, w2, preferred_element_type=jnp.float32) + b2
        i, f, o, gg = activate(gates)
        c = f * c + i * gg
        return o * jnp.tanh(c), c

    def out_linear(x_t, h1_, h2_):
        hc = jnp.concatenate([h1_, h2_], axis=1)                                    # (B, 2H) f32
        return x_t * wlx + jnp.sum(hc * wl, axis=1, keepdims=True) + bl             # (B, 1)

    # ---- history loop (static unroll; n_his >= 1). Per-step output is dead except at the end.
    for t in range(n_his):
        h1, c1 = cell1(x_bf[:, t:t + 1], h1, c1)
        h2, c2 = cell2(h1, h2, c2)
    out = out_linear(x[:, n_his - 1:n_his], h1, h2)

    # ---- future = 1 autoregressive step, feeding the previous output back in.
    out_prev = out
    h1, c1 = cell1(out_prev, h1, c1)
    h2, c2 = cell2(h1, h2, c2)
    out = out_linear(out_prev, h1, h2)                                              # (B, 1) f32

    # ---- Gate MLP on the full factor (eval: dropout identity, BN folded); bf16 MXU matmuls.
    gh = jnp.dot(x_bf, gw1, preferred_element_type=jnp.float32) + gb1
    gh = jnp.maximum(gh, 0.0)
    gh = jnp.dot(gh.astype(jnp.bfloat16), gw2, preferred_element_type=jnp.float32) + gb2
    gh = jnp.maximum(gh, 0.0)                                                       # (B, 64) f32

    # ---- lane-dense epilogue: one (B,128) transpose, gate reduction as a (1,64)x(64,B) matmul.
    ext = jnp.concatenate([gh, jnp.broadcast_to(out, (B, H))], axis=1)              # (B, 128) f32
    extT = jnp.transpose(ext)                                                       # (128, B)
    gate_row = sigmoid(
        jnp.dot(gw3, extT[0:H, :], preferred_element_type=jnp.float32) + gb3)       # (1, B)
    out_ref[...] = extT[H:H + 1, :] * gate_row                                      # (1, bb)


def _choose_tiling(B):
    """Returns (padded batch, batch tile).  >=2 grid steps for B>=256 (v7x 2-TC sharding,
    v6e DMA pipelining, bounded VMEM live set); never falls back to tiny tiles."""
    if B < 256:
        bp = max(8, ((B + 7) // 8) * 8)
        return bp, bp                       # single block (full-dim block is always legal)
    bp = ((B + 127) // 128) * 128           # keep MXU rows full instead of tiny-tile fallback
    for bb in (512, 256, 128):
        if bp % bb == 0 and bp // bb >= 2:
            return bp, bb
    return bp, 128


@functools.partial(jax.jit, static_argnames=("n_his",))
def gate_sequence_forward(x, packed, n_his):
    """x: (B, n_his+1, 1) float32 -> (B, 1, 1) float32."""
    assert n_his >= 1, "Sequence forward requires at least one history step"
    B = x.shape[0]
    T = n_his + 1
    factor = x[:, :, 0]                     # == x.squeeze() (trailing feature dim is 1)
    B_pad, bb = _choose_tiling(B)
    if B_pad != B:
        factor = jnp.pad(factor, ((0, B_pad - B), (0, 0)))
    grid = (B_pad // bb,)

    flops_lstm = 2 * T * ((H + 2) + 2 * H) * 4 * H          # per batch row, 9 serial steps
    flops_gate = 2 * T * H + 2 * H * H + 2 * H
    cost = pl.CostEstimate(
        flops=B_pad * (flops_lstm + flops_gate),
        transcendentals=B_pad * (T * 10 * H + 1),
        bytes_accessed=B_pad * (T + 1) * 4
        + packed["w_rec"].size * 2 + packed["w_gate"].size * 2 + packed["w_row"].size * 4,
    )

    out = pl.pallas_call(
        functools.partial(gate_sequence_kernel, n_his=n_his),
        out_shape=jax.ShapeDtypeStruct((1, B_pad), jnp.float32),
        grid=grid,
        in_specs=[
            pl.BlockSpec((bb, T), lambda i: (i, 0)),                    # factor (batch-tiled)
            pl.BlockSpec(packed["w_rec"].shape, lambda i: (0, 0)),      # resident weights
            pl.BlockSpec(packed["w_gate"].shape, lambda i: (0, 0)),
            pl.BlockSpec(packed["w_row"].shape, lambda i: (0, 0)),
        ],
        out_specs=pl.BlockSpec((1, bb), lambda i: (0, i)),              # lane-dense output
        compiler_params=pltpu.CompilerParams(dimension_semantics=("parallel",)),
        cost_estimate=cost,
    )(factor, packed["w_rec"], packed["w_gate"], packed["w_row"])

    # Sequence returns output.unsqueeze(1): (B,1) -> (B,1,1); gate broadcasts over the new dim.
    return out[0, :B].reshape(B, 1, 1)


# ------------------------ parameter init (deterministic, PyTorch-style) ------------------------
def _uniform(key, shape, k):
    return jax.random.uniform(key, shape, jnp.float32, -k, k)


def init_params(key, n_his):
    ks = jax.random.split(key, 16)
    kH = 1.0 / float(jnp.sqrt(jnp.float32(H)))
    # nn.LSTMCell(1, H)
    w_ih1 = _uniform(ks[0], (4 * H, 1), kH)
    w_hh1 = _uniform(ks[1], (4 * H, H), kH)
    b_ih1 = _uniform(ks[2], (4 * H,), kH)
    b_hh1 = _uniform(ks[3], (4 * H,), kH)
    # nn.LSTMCell(H, H)
    w_ih2 = _uniform(ks[4], (4 * H, H), kH)
    w_hh2 = _uniform(ks[5], (4 * H, H), kH)
    b_ih2 = _uniform(ks[6], (4 * H,), kH)
    b_hh2 = _uniform(ks[7], (4 * H,), kH)
    # nn.Linear(2H+1, 1)
    kL = 1.0 / float(jnp.sqrt(jnp.float32(2 * H + 1)))
    w_lin = _uniform(ks[8], (1, 2 * H + 1), kL)
    b_lin = _uniform(ks[9], (1,), kL)
    # Gate: Linear(n_his+1, 64) / BN / Linear(64,64) / BN / Linear(64,1)
    kg1 = 1.0 / float(jnp.sqrt(jnp.float32(n_his + 1)))
    gW1 = _uniform(ks[10], (64, n_his + 1), kg1)
    gb1 = _uniform(ks[11], (64,), kg1)
    kg2 = 1.0 / float(jnp.sqrt(jnp.float32(64)))
    gW2 = _uniform(ks[12], (64, 64), kg2)
    gb2 = _uniform(ks[13], (64,), kg2)
    gW3 = _uniform(ks[14], (1, 64), kg2)
    gb3 = _uniform(ks[15], (1,), kg2)
    # BatchNorm1d(64) inference params (fresh module: gamma=1, beta=0, mean=0, var=1).
    eps = 1e-5
    gamma = jnp.ones((64,), jnp.float32)
    beta = jnp.zeros((64,), jnp.float32)
    rmean = jnp.zeros((64,), jnp.float32)
    rvar = jnp.ones((64,), jnp.float32)
    s1 = gamma / jnp.sqrt(rvar + eps); sh1 = beta - rmean * s1
    s2 = gamma / jnp.sqrt(rvar + eps); sh2 = beta - rmean * s2

    return dict(
        wih1=w_ih1.T, whh1=w_hh1.T, b1=(b_ih1 + b_hh1)[None, :],
        wih2=w_ih2.T, whh2=w_hh2.T, b2=(b_ih2 + b_hh2)[None, :],
        wlx=w_lin[:, 0:1], wlh1=w_lin[:, 1:H + 1].T, wlh2=w_lin[:, H + 1:].T,
        bl=b_lin[None, :],
        gw1=gW1.T, gb1=gb1[None, :], gs1=s1[None, :], gsh1=sh1[None, :],
        gw2=gW2.T, gb2=gb2[None, :], gs2=s2[None, :], gsh2=sh2[None, :],
        gw3=gW3.T, gb3=gb3[None, :],
    )


# ------------------------- host-side packing into a few kernel buffers -------------------------
def pack_params(p, n_his):
    T = n_his + 1

    def reorder(w):  # last-dim 4H blocks: PyTorch [i,f,g,o] -> kernel [i,f,o,g]
        return jnp.concatenate(
            [w[..., 0:2 * H], w[..., 3 * H:4 * H], w[..., 2 * H:3 * H]], axis=-1)

    # bf16 MXU block: [whh1; wih1; b1] (cell1 fully folded) + fused lstm2 [wih2; whh2].
    w1_full = jnp.concatenate(
        [reorder(p["whh1"]), reorder(p["wih1"]), reorder(p["b1"])], axis=0)      # (H+2, 4H)
    w2 = reorder(jnp.concatenate([p["wih2"], p["whh2"]], axis=0))                # (2H, 4H)
    w_rec = jnp.zeros((_W2_OFF + 2 * H, 4 * H), jnp.float32)
    w_rec = w_rec.at[0:H + 2].set(w1_full)
    w_rec = w_rec.at[_W2_OFF:_W2_OFF + 2 * H].set(w2)
    w_rec = w_rec.astype(jnp.bfloat16)

    # Gate MLP with eval-mode BatchNorm folded in; packed lane-dense (128 lanes) in bf16.
    gw1 = p["gw1"] * p["gs1"]
    gb1 = p["gb1"] * p["gs1"] + p["gsh1"]
    gw2 = p["gw2"] * p["gs2"]
    gb2 = p["gb2"] * p["gs2"] + p["gsh2"]
    g_rows = ((max(T, 64) + 15) // 16) * 16
    w_gate = jnp.zeros((g_rows, 2 * H), jnp.float32)
    w_gate = w_gate.at[0:T, 0:H].set(gw1)
    w_gate = w_gate.at[0:H, H:2 * H].set(gw2)
    w_gate = w_gate.astype(jnp.bfloat16)

    # f32 row-vector / scalar block.
    wl = jnp.concatenate([p["wlh1"], p["wlh2"]], axis=0)[:, 0]                   # (2H,)
    w_row = jnp.zeros((8, 4 * H), jnp.float32)
    w_row = w_row.at[0].set(reorder(p["b2"])[0])
    w_row = w_row.at[1, 0:2 * H].set(wl)
    w_row = w_row.at[1, 2 * H].set(p["wlx"][0, 0])
    w_row = w_row.at[2, 0].set(p["bl"][0, 0])
    w_row = w_row.at[2, 1].set(p["gb3"][0, 0])
    w_row = w_row.at[3, 0:H].set(gb1[0])
    w_row = w_row.at[4, 0:H].set(gb2[0])
    w_row = w_row.at[5, 0:H].set(p["gw3"][:, 0])

    return dict(w_rec=w_rec, w_gate=w_gate, w_row=w_row)


# ------------------------------- pure-JAX reference (for checking) -----------------------------
def reference_forward(x, p, n_his):
    factor = x[:, :, 0]
    B = x.shape[0]

    def cell(gx, h, c, whh, b):
        gates = gx + h @ whh + b
        i = jax.nn.sigmoid(gates[:, :H]); f = jax.nn.sigmoid(gates[:, H:2 * H])
        g = jnp.tanh(gates[:, 2 * H:3 * H]); o = jax.nn.sigmoid(gates[:, 3 * H:])
        c = f * c + i * g
        return o * jnp.tanh(c), c

    h1 = c1 = h2 = c2 = jnp.zeros((B, H), jnp.float32)

    def step(x_t, h1, c1, h2, c2):
        h1, c1 = cell(x_t * p["wih1"], h1, c1, p["whh1"], p["b1"])
        h2, c2 = cell(h1 @ p["wih2"], h2, c2, p["whh2"], p["b2"])
        out = x_t * p["wlx"] + h1 @ p["wlh1"] + h2 @ p["wlh2"] + p["bl"]
        return out, h1, c1, h2, c2

    out = jnp.zeros((B, 1), jnp.float32)
    for t in range(n_his):
        out, h1, c1, h2, c2 = step(factor[:, t:t + 1], h1, c1, h2, c2)
    out, h1, c1, h2, c2 = step(out, h1, c1, h2, c2)

    g = factor @ p["gw1"] + p["gb1"]
    g = jnp.maximum(g * p["gs1"] + p["gsh1"], 0.0)
    g = g @ p["gw2"] + p["gb2"]
    g = jnp.maximum(g * p["gs2"] + p["gsh2"], 0.0)
    g = jax.nn.sigmoid(g @ p["gw3"] + p["gb3"])
    return (out * g)[:, :, None]


if __name__ == "__main__":
    B, n_his = 8, 8                                   # args.n_his = 8, args.gate = True
    key = jax.random.PRNGKey(0)
    params = init_params(key, n_his)
    packed = pack_params(params, n_his)
    x = jax.random.normal(jax.random.fold_in(key, 123), (B, n_his + 1, 1), jnp.float32)

    out = gate_sequence_forward(x, packed, n_his)
    out = jax.block_until_ready(out)
    assert out.shape == (B, 1, 1), out.shape

    ref = reference_forward(x, params, n_his)
    # tolerance accounts for bf16 MXU inputs on the 9-step recurrence (f32 accumulation);
    # re-validate (or keep recurrent matmuls in f32) if n_his grows substantially.
    if not bool(jnp.allclose(out, ref, atol=3e-2, rtol=3e-2)):
        raise AssertionError(f"mismatch: max |diff| = {float(jnp.abs(out - ref).max())}")

    print("KERNEL_OK")
</pallas_src>

<mosaic_0001>
module attributes {stable_mosaic.version = 11 : i64} {
  func.func @gate_sequence_kernel(%arg0: i32, %arg1: memref<8x9xf32, #tpu.memory_space<vmem>>, %arg2: memref<208x256xbf16, #tpu.memory_space<vmem>>, %arg3: memref<64x128xbf16, #tpu.memory_space<vmem>>, %arg4: memref<8x256xf32, #tpu.memory_space<vmem>>, %arg5: memref<1x8xf32, #tpu.memory_space<vmem>>) attributes {dimension_semantics = [#tpu.dimension_semantics<parallel>], iteration_bounds = array<i64: 1>, scalar_prefetch = 0 : i64, scratch_operands = 0 : i64, tpu.core_type = #tpu.core_type<tc>, window_params = [{transform_indices = @transform_0, window_bounds = array<i64: 8, 9>}, {pipeline_mode = #tpu.pipeline_mode<synchronous>, transform_indices = @transform_1, window_bounds = array<i64: 208, 256>}, {pipeline_mode = #tpu.pipeline_mode<synchronous>, transform_indices = @transform_2, window_bounds = array<i64: 64, 128>}, {pipeline_mode = #tpu.pipeline_mode<synchronous>, transform_indices = @transform_3, window_bounds = array<i64: 8, 256>}, {transform_indices = @transform_4, window_bounds = array<i64: 1, 8>}]} {
    %c0 = arith.constant 0 : index
    %c0_0 = arith.constant 0 : index
    %0 = vector.load %arg1[%c0, %c0_0] : memref<8x9xf32, #tpu.memory_space<vmem>>, vector<8x9xf32>
    %1 = arith.truncf %0 : vector<8x9xf32> to vector<8x9xbf16>
    %c0_1 = arith.constant 0 : index
    %c0_2 = arith.constant 0 : index
    %2 = vector.load %arg2[%c0_1, %c0_2] : memref<208x256xbf16, #tpu.memory_space<vmem>>, vector<208x256xbf16>
    %3 = vector.extract_strided_slice %2 {offsets = [0, 0], sizes = [66, 256], strides = [1, 1]} : vector<208x256xbf16> to vector<66x256xbf16>
    %4 = vector.extract_strided_slice %2 {offsets = [80, 0], sizes = [128, 256], strides = [1, 1]} : vector<208x256xbf16> to vector<128x256xbf16>
    %c0_3 = arith.constant 0 : index
    %c0_4 = arith.constant 0 : index
    %5 = vector.load %arg3[%c0_3, %c0_4] : memref<64x128xbf16, #tpu.memory_space<vmem>>, vector<64x128xbf16>
    %6 = vector.extract_strided_slice %5 {offsets = [0, 0], sizes = [9, 64], strides = [1, 1]} : vector<64x128xbf16> to vector<9x64xbf16>
    %7 = vector.extract_strided_slice %5 {offsets = [0, 64], sizes = [64, 64], strides = [1, 1]} : vector<64x128xbf16> to vector<64x64xbf16>
    %c0_5 = arith.constant 0 : index
    %c0_6 = arith.constant 0 : index
    %8 = vector.load %arg4[%c0_5, %c0_6] : memref<8x256xf32, #tpu.memory_space<vmem>>, vector<8x256xf32>
    %9 = vector.extract_strided_slice %8 {offsets = [0, 0], sizes = [1, 256], strides = [1, 1]} : vector<8x256xf32> to vector<1x256xf32>
    %10 = vector.extract_strided_slice %8 {offsets = [1, 0], sizes = [1, 128], strides = [1, 1]} : vector<8x256xf32> to vector<1x128xf32>
    %11 = vector.extract_strided_slice %8 {offsets = [1, 128], sizes = [1, 1], strides = [1, 1]} : vector<8x256xf32> to vector<1x1xf32>
    %12 = vector.extract_strided_slice %8 {offsets = [2, 0], sizes = [1, 1], strides = [1, 1]} : vector<8x256xf32> to vector<1x1xf32>
    %13 = vector.extract_strided_slice %8 {offsets = [2, 1], sizes = [1, 1], strides = [1, 1]} : vector<8x256xf32> to vector<1x1xf32>
    %14 = vector.extract_strided_slice %8 {offsets = [3, 0], sizes = [1, 64], strides = [1, 1]} : vector<8x256xf32> to vector<1x64xf32>
    %15 = vector.extract_strided_slice %8 {offsets = [4, 0], sizes = [1, 64], strides = [1, 1]} : vector<8x256xf32> to vector<1x64xf32>
    %16 = vector.extract_strided_slice %8 {offsets = [5, 0], sizes = [1, 64], strides = [1, 1]} : vector<8x256xf32> to vector<1x64xf32>
    %cst = arith.constant 1.000000e+00 : bf16
    %17 = vector.broadcast %cst : bf16 to vector<8x1xbf16>
    %cst_7 = arith.constant 0.000000e+00 : f32
    %18 = vector.broadcast %cst_7 : f32 to vector<8x64xf32>
    %cst_8 = arith.constant 0.000000e+00 : f32
    %19 = vector.broadcast %cst_8 : f32 to vector<8x64xf32>
    %cst_9 = arith.constant 0.000000e+00 : f32
    %20 = vector.broadcast %cst_9 : f32 to vector<8x64xf32>
    %cst_10 = arith.constant 0.000000e+00 : f32
    %21 = vector.broadcast %cst_10 : f32 to vector<8x64xf32>
    %22 = vector.extract_strided_slice %1 {offsets = [0, 0], sizes = [8, 1], strides = [1, 1]} : vector<8x9xbf16> to vector<8x1xbf16>
    %23 = arith.truncf %18 : vector<8x64xf32> to vector<8x64xbf16>
    %24 = tpu.concatenate %23, %22, %17 in 1 : vector<8x64xbf16>, vector<8x1xbf16>, vector<8x1xbf16> -> vector<8x66xbf16>
    %cst_11 = arith.constant dense<0.000000e+00> : vector<8x256xf32>
    %25 = tpu.matmul %24, %3, %cst_11 {dimension_numbers = #tpu.dot_dimension_numbers<[1], [0], [0], [1], [0, 0, 1, 1], [], []>} : vector<8x66xbf16>, vector<66x256xbf16>, vector<8x256xf32> -> vector<8x256xf32>
    %26 = vector.extract_strided_slice %25 {offsets = [0, 0], sizes = [8, 192], strides = [1, 1]} : vector<8x256xf32> to vector<8x192xf32>
    %cst_12 = arith.constant 5.000000e-01 : f32
    %27 = vector.broadcast %cst_12 : f32 to vector<8x192xf32>
    %28 = arith.mulf %27, %26 : vector<8x192xf32>
    %29 = math.tanh %28 : vector<8x192xf32>
    %cst_13 = arith.constant 1.000000e+00 : f32
    %30 = vector.broadcast %cst_13 : f32 to vector<8x192xf32>
    %31 = arith.addf %29, %30 : vector<8x192xf32>
    %cst_14 = arith.constant 5.000000e-01 : f32
    %32 = vector.broadcast %cst_14 : f32 to vector<8x192xf32>
    %33 = arith.mulf %32, %31 : vector<8x192xf32>
    %34 = vector.extract_strided_slice %25 {offsets = [0, 192], sizes = [8, 64], strides = [1, 1]} : vector<8x256xf32> to vector<8x64xf32>
    %35 = math.tanh %34 : vector<8x64xf32>
    %36 = vector.extract_strided_slice %33 {offsets = [0, 0], sizes = [8, 64], strides = [1, 1]} : vector<8x192xf32> to vector<8x64xf32>
    %37 = vector.extract_strided_slice %33 {offsets = [0, 64], sizes = [8, 64], strides = [1, 1]} : vector<8x192xf32> to vector<8x64xf32>
    %38 = vector.extract_strided_slice %33 {offsets = [0, 128], sizes = [8, 64], strides = [1, 1]} : vector<8x192xf32> to vector<8x64xf32>
    %39 = arith.mulf %37, %19 : vector<8x64xf32>
    %40 = arith.mulf %36, %35 : vector<8x64xf32>
    %41 = arith.addf %39, %40 : vector<8x64xf32>
    %42 = math.tanh %41 : vector<8x64xf32>
    %43 = arith.mulf %38, %42 : vector<8x64xf32>
    %44 = tpu.concatenate %43, %20 in 1 : vector<8x64xf32>, vector<8x64xf32> -> vector<8x128xf32>
    %45 = arith.truncf %44 : vector<8x128xf32> to vector<8x128xbf16>
    %cst_15 = arith.constant dense<0.000000e+00> : vector<8x256xf32>
    %46 = tpu.matmul %45, %4, %cst_15 {dimension_numbers = #tpu.dot_dimension_numbers<[1], [0], [0], [1], [0, 0, 1, 1], [], []>} : vector<8x128xbf16>, vector<128x256xbf16>, vector<8x256xf32> -> vector<8x256xf32>
    %47 = vector.broadcast %9 : vector<1x256xf32> to vector<8x256xf32>
    %48 = arith.addf %46, %47 : vector<8x256xf32>
    %49 = vector.extract_strided_slice %48 {offsets = [0, 0], sizes = [8, 192], strides = [1, 1]} : vector<8x256xf32> to vector<8x192xf32>
    %cst_16 = arith.constant 5.000000e-01 : f32
    %50 = vector.broadcast %cst_16 : f32 to vector<8x192xf32>
    %51 = arith.mulf %50, %49 : vector<8x192xf32>
    %52 = math.tanh %51 : vector<8x192xf32>
    %cst_17 = arith.constant 1.000000e+00 : f32
    %53 = vector.broadcast %cst_17 : f32 to vector<8x192xf32>
    %54 = arith.addf %52, %53 : vector<8x192xf32>
    %cst_18 = arith.constant 5.000000e-01 : f32
    %55 = vector.broadcast %cst_18 : f32 to vector<8x192xf32>
    %56 = arith.mulf %55, %54 : vector<8x192xf32>
    %57 = vector.extract_strided_slice %48 {offsets = [0, 192], sizes = [8, 64], strides = [1, 1]} : vector<8x256xf32> to vector<8x64xf32>
    %58 = math.tanh %57 : vector<8x64xf32>
    %59 = vector.extract_strided_slice %56 {offsets = [0, 0], sizes = [8, 64], strides = [1, 1]} : vector<8x192xf32> to vector<8x64xf32>
    %60 = vector.extract_strided_slice %56 {offsets = [0, 64], sizes = [8, 64], strides = [1, 1]} : vector<8x192xf32> to vector<8x64xf32>
    %61 = vector.extract_strided_slice %56 {offsets = [0, 128], sizes = [8, 64], strides = [1, 1]} : vector<8x192xf32> to vector<8x64xf32>
    %62 = arith.mulf %60, %21 : vector<8x64xf32>
    %63 = arith.mulf %59, %58 : vector<8x64xf32>
    %64 = arith.addf %62, %63 : vector<8x64xf32>
    %65 = math.tanh %64 : vector<8x64xf32>
    %66 = arith.mulf %61, %65 : vector<8x64xf32>
    %67 = vector.extract_strided_slice %1 {offsets = [0, 1], sizes = [8, 1], strides = [1, 1]} : vector<8x9xbf16> to vector<8x1xbf16>
    %68 = arith.truncf %43 : vector<8x64xf32> to vector<8x64xbf16>
    %69 = tpu.concatenate %68, %67, %17 in 1 : vector<8x64xbf16>, vector<8x1xbf16>, vector<8x1xbf16> -> vector<8x66xbf16>
    %cst_19 = arith.constant dense<0.000000e+00> : vector<8x256xf32>
    %70 = tpu.matmul %69, %3, %cst_19 {dimension_numbers = #tpu.dot_dimension_numbers<[1], [0], [0], [1], [0, 0, 1, 1], [], []>} : vector<8x66xbf16>, vector<66x256xbf16>, vector<8x256xf32> -> vector<8x256xf32>
    %71 = vector.extract_strided_slice %70 {offsets = [0, 0], sizes = [8, 192], strides = [1, 1]} : vector<8x256xf32> to vector<8x192xf32>
    %cst_20 = arith.constant 5.000000e-01 : f32
    %72 = vector.broadcast %cst_20 : f32 to vector<8x192xf32>
    %73 = arith.mulf %72, %71 : vector<8x192xf32>
    %74 = math.tanh %73 : vector<8x192xf32>
    %cst_21 = arith.constant 1.000000e+00 : f32
    %75 = vector.broadcast %cst_21 : f32 to vector<8x192xf32>
    %76 = arith.addf %74, %75 : vector<8x192xf32>
    %cst_22 = arith.constant 5.000000e-01 : f32
    %77 = vector.broadcast %cst_22 : f32 to vector<8x192xf32>
    %78 = arith.mulf %77, %76 : vector<8x192xf32>
    %79 = vector.extract_strided_slice %70 {offsets = [0, 192], sizes = [8, 64], strides = [1, 1]} : vector<8x256xf32> to vector<8x64xf32>
    %80 = math.tanh %79 : vector<8x64xf32>
    %81 = vector.extract_strided_slice %78 {offsets = [0, 0], sizes = [8, 64], strides = [1, 1]} : vector<8x192xf32> to vector<8x64xf32>
    %82 = vector.extract_strided_slice %78 {offsets = [0, 64], sizes = [8, 64], strides = [1, 1]} : vector<8x192xf32> to vector<8x64xf32>
    %83 = vector.extract_strided_slice %78 {offsets = [0, 128], sizes = [8, 64], strides = [1, 1]} : vector<8x192xf32> to vector<8x64xf32>
    %84 = arith.mulf %82, %41 : vector<8x64xf32>
    %85 = arith.mulf %81, %80 : vector<8x64xf32>
    %86 = arith.addf %84, %85 : vector<8x64xf32>
    %87 = math.tanh %86 : vector<8x64xf32>
    %88 = arith.mulf %83, %87 : vector<8x64xf32>
    %89 = tpu.concatenate %88, %66 in 1 : vector<8x64xf32>, vector<8x64xf32> -> vector<8x128xf32>
    %90 = arith.truncf %89 : vector<8x128xf32> to vector<8x128xbf16>
    %cst_23 = arith.constant dense<0.000000e+00> : vector<8x256xf32>
    %91 = tpu.matmul %90, %4, %cst_23 {dimension_numbers = #tpu.dot_dimension_numbers<[1], [0], [0], [1], [0, 0, 1, 1], [], []>} : vector<8x128xbf16>, vector<128x256xbf16>, vector<8x256xf32> -> vector<8x256xf32>
    %92 = vector.broadcast %9 : vector<1x256xf32> to vector<8x256xf32>
    %93 = arith.addf %91, %92 : vector<8x256xf32>
    %94 = vector.extract_strided_slice %93 {offsets = [0, 0], sizes = [8, 192], strides = [1, 1]} : vector<8x256xf32> to vector<8x192xf32>
    %cst_24 = arith.constant 5.000000e-01 : f32
    %95 = vector.broadcast %cst_24 : f32 to vector<8x192xf32>
    %96 = arith.mulf %95, %94 : vector<8x192xf32>
    %97 = math.tanh %96 : vector<8x192xf32>
    %cst_25 = arith.constant 1.000000e+00 : f32
    %98 = vector.broadcast %cst_25 : f32 to vector<8x192xf32>
    %99 = arith.addf %97, %98 : vector<8x192xf32>
    %cst_26 = arith.constant 5.000000e-01 : f32
    %100 = vector.broadcast %cst_26 : f32 to vector<8x192xf32>
    %101 = arith.mulf %100, %99 : vector<8x192xf32>
    %102 = vector.extract_strided_slice %93 {offsets = [0, 192], sizes = [8, 64], strides = [1, 1]} : vector<8x256xf32> to vector<8x64xf32>
    %103 = math.tanh %102 : vector<8x64xf32>
    %104 = vector.extract_strided_slice %101 {offsets = [0, 0], sizes = [8, 64], strides = [1, 1]} : vector<8x192xf32> to vector<8x64xf32>
    %105 = vector.extract_strided_slice %101 {offsets = [0, 64], sizes = [8, 64], strides = [1, 1]} : vector<8x192xf32> to vector<8x64xf32>
    %106 = vector.extract_strided_slice %101 {offsets = [0, 128], sizes = [8, 64], strides = [1, 1]} : vector<8x192xf32> to vector<8x64xf32>
    %107 = arith.mulf %105, %64 : vector<8x64xf32>
    %108 = arith.mulf %104, %103 : vector<8x64xf32>
    %109 = arith.addf %107, %108 : vector<8x64xf32>
    %110 = math.tanh %109 : vector<8x64xf32>
    %111 = arith.mulf %106, %110 : vector<8x64xf32>
    %112 = vector.extract_strided_slice %1 {offsets = [0, 2], sizes = [8, 1], strides = [1, 1]} : vector<8x9xbf16> to vector<8x1xbf16>
    %113 = arith.truncf %88 : vector<8x64xf32> to vector<8x64xbf16>
    %114 = tpu.concatenate %113, %112, %17 in 1 : vector<8x64xbf16>, vector<8x1xbf16>, vector<8x1xbf16> -> vector<8x66xbf16>
    %cst_27 = arith.constant dense<0.000000e+00> : vector<8x256xf32>
    %115 = tpu.matmul %114, %3, %cst_27 {dimension_numbers = #tpu.dot_dimension_numbers<[1], [0], [0], [1], [0, 0, 1, 1], [], []>} : vector<8x66xbf16>, vector<66x256xbf16>, vector<8x256xf32> -> vector<8x256xf32>
    %116 = vector.extract_strided_slice %115 {offsets = [0, 0], sizes = [8, 192], strides = [1, 1]} : vector<8x256xf32> to vector<8x192xf32>
    %cst_28 = arith.constant 5.000000e-01 : f32
    %117 = vector.broadcast %cst_28 : f32 to vector<8x192xf32>
    %118 = arith.mulf %117, %116 : vector<8x192xf32>
    %119 = math.tanh %118 : vector<8x192xf32>
    %cst_29 = arith.constant 1.000000e+00 : f32
    %120 = vector.broadcast %cst_29 : f32 to vector<8x192xf32>
    %121 = arith.addf %119, %120 : vector<8x192xf32>
    %cst_30 = arith.constant 5.000000e-01 : f32
    %122 = vector.broadcast %cst_30 : f32 to vector<8x192xf32>
    %123 = arith.mulf %122, %121 : vector<8x192xf32>
    %124 = vector.extract_strided_slice %115 {offsets = [0, 192], sizes = [8, 64], strides = [1, 1]} : vector<8x256xf32> to vector<8x64xf32>
    %125 = math.tanh %124 : vector<8x64xf32>
    %126 = vector.extract_strided_slice %123 {offsets = [0, 0], sizes = [8, 64], strides = [1, 1]} : vector<8x192xf32> to vector<8x64xf32>
    %127 = vector.extract_strided_slice %123 {offsets = [0, 64], sizes = [8, 64], strides = [1, 1]} : vector<8x192xf32> to vector<8x64xf32>
    %128 = vector.extract_strided_slice %123 {offsets = [0, 128], sizes = [8, 64], strides = [1, 1]} : vector<8x192xf32> to vector<8x64xf32>
    %129 = arith.mulf %127, %86 : vector<8x64xf32>
    %130 = arith.mulf %126, %125 : vector<8x64xf32>
    %131 = arith.addf %129, %130 : vector<8x64xf32>
    %132 = math.tanh %131 : vector<8x64xf32>
    %133 = arith.mulf %128, %132 : vector<8x64xf32>
    %134 = tpu.concatenate %133, %111 in 1 : vector<8x64xf32>, vector<8x64xf32> -> vector<8x128xf32>
    %135 = arith.truncf %134 : vector<8x128xf32> to vector<8x128xbf16>
    %cst_31 = arith.constant dense<0.000000e+00> : vector<8x256xf32>
    %136 = tpu.matmul %135, %4, %cst_31 {dimension_numbers = #tpu.dot_dimension_numbers<[1], [0], [0], [1], [0, 0, 1, 1], [], []>} : vector<8x128xbf16>, vector<128x256xbf16>, vector<8x256xf32> -> vector<8x256xf32>
    %137 = vector.broadcast %9 : vector<1x256xf32> to vector<8x256xf32>
    %138 = arith.addf %136, %137 : vector<8x256xf32>
    %139 = vector.extract_strided_slice %138 {offsets = [0, 0], sizes = [8, 192], strides = [1, 1]} : vector<8x256xf32> to vector<8x192xf32>
    %cst_32 = arith.constant 5.000000e-01 : f32
    %140 = vector.broadcast %cst_32 : f32 to vector<8x192xf32>
    %141 = arith.mulf %140, %139 : vector<8x192xf32>
    %142 = math.tanh %141 : vector<8x192xf32>
    %cst_33 = arith.constant 1.000000e+00 : f32
    %143 = vector.broadcast %cst_33 : f32 to vector<8x192xf32>
    %144 = arith.addf %142, %143 : vector<8x192xf32>
    %cst_34 = arith.constant 5.000000e-01 : f32
    %145 = vector.broadcast %cst_34 : f32 to vector<8x192xf32>
    %146 = arith.mulf %145, %144 : vector<8x192xf32>
    %147 = vector.extract_strided_slice %138 {offsets = [0, 192], sizes = [8, 64], strides = [1, 1]} : vector<8x256xf32> to vector<8x64xf32>
    %148 = math.tanh %147 : vector<8x64xf32>
    %149 = vector.extract_strided_slice %146 {offsets = [0, 0], sizes = [8, 64], strides = [1, 1]} : vector<8x192xf32> to vector<8x64xf32>
    %150 = vector.extract_strided_slice %146 {offsets = [0, 64], sizes = [8, 64], strides = [1, 1]} : vector<8x192xf32> to vector<8x64xf32>
    %151 = vector.extract_strided_slice %146 {offsets = [0, 128], sizes = [8, 64], strides = [1, 1]} : vector<8x192xf32> to vector<8x64xf32>
    %152 = arith.mulf %150, %109 : vector<8x64xf32>
    %153 = arith.mulf %149, %148 : vector<8x64xf32>
    %154 = arith.addf %152, %153 : vector<8x64xf32>
    %155 = math.tanh %154 : vector<8x64xf32>
    %156 = arith.mulf %151, %155 : vector<8x64xf32>
    %157 = vector.extract_strided_slice %1 {offsets = [0, 3], sizes = [8, 1], strides = [1, 1]} : vector<8x9xbf16> to vector<8x1xbf16>
    %158 = arith.truncf %133 : vector<8x64xf32> to vector<8x64xbf16>
    %159 = tpu.concatenate %158, %157, %17 in 1 : vector<8x64xbf16>, vector<8x1xbf16>, vector<8x1xbf16> -> vector<8x66xbf16>
    %cst_35 = arith.constant dense<0.000000e+00> : vector<8x256xf32>
    %160 = tpu.matmul %159, %3, %cst_35 {dimension_numbers = #tpu.dot_dimension_numbers<[1], [0], [0], [1], [0, 0, 1, 1], [], []>} : vector<8x66xbf16>, vector<66x256xbf16>, vector<8x256xf32> -> vector<8x256xf32>
    %161 = vector.extract_strided_slice %160 {offsets = [0, 0], sizes = [8, 192], strides = [1, 1]} : vector<8x256xf32> to vector<8x192xf32>
    %cst_36 = arith.constant 5.000000e-01 : f32
    %162 = vector.broadcast %cst_36 : f32 to vector<8x192xf32>
    %163 = arith.mulf %162, %161 : vector<8x192xf32>
    %164 = math.tanh %163 : vector<8x192xf32>
    %cst_37 = arith.constant 1.000000e+00 : f32
    %165 = vector.broadcast %cst_37 : f32 to vector<8x192xf32>
    %166 = arith.addf %164, %165 : vector<8x192xf32>
    %cst_38 = arith.constant 5.000000e-01 : f32
    %167 = vector.broadcast %cst_38 : f32 to vector<8x192xf32>
    %168 = arith.mulf %167, %166 : vector<8x192xf32>
    %169 = vector.extract_strided_slice %160 {offsets = [0, 192], sizes = [8, 64], strides = [1, 1]} : vector<8x256xf32> to vector<8x64xf32>
    %170 = math.tanh %169 : vector<8x64xf32>
    %171 = vector.extract_strided_slice %168 {offsets = [0, 0], sizes = [8, 64], strides = [1, 1]} : vector<8x192xf32> to vector<8x64xf32>
    %172 = vector.extract_strided_slice %168 {offsets = [0, 64], sizes = [8, 64], strides = [1, 1]} : vector<8x192xf32> to vector<8x64xf32>
    %173 = vector.extract_strided_slice %168 {offsets = [0, 128], sizes = [8, 64], strides = [1, 1]} : vector<8x192xf32> to vector<8x64xf32>
    %174 = arith.mulf %172, %131 : vector<8x64xf32>
    %175 = arith.mulf %171, %170 : vector<8x64xf32>
    %176 = arith.addf %174, %175 : vector<8x64xf32>
    %177 = math.tanh %176 : vector<8x64xf32>
    %178 = arith.mulf %173, %177 : vector<8x64xf32>
    %179 = tpu.concatenate %178, %156 in 1 : vector<8x64xf32>, vector<8x64xf32> -> vector<8x128xf32>
    %180 = arith.truncf %179 : vector<8x128xf32> to vector<8x128xbf16>
    %cst_39 = arith.constant dense<0.000000e+00> : vector<8x256xf32>
    %181 = tpu.matmul %180, %4, %cst_39 {dimension_numbers = #tpu.dot_dimension_numbers<[1], [0], [0], [1], [0, 0, 1, 1], [], []>} : vector<8x128xbf16>, vector<128x256xbf16>, vector<8x256xf32> -> vector<8x256xf32>
    %182 = vector.broadcast %9 : vector<1x256xf32> to vector<8x256xf32>
    %183 = arith.addf %181, %182 : vector<8x256xf32>
    %184 = vector.extract_strided_slice %183 {offsets = [0, 0], sizes = [8, 192], strides = [1, 1]} : vector<8x256xf32> to vector<8x192xf32>
    %cst_40 = arith.constant 5.000000e-01 : f32
    %185 = vector.broadcast %cst_40 : f32 to vector<8x192xf32>
    %186 = arith.mulf %185, %184 : vector<8x192xf32>
    %187 = math.tanh %186 : vector<8x192xf32>
    %cst_41 = arith.constant 1.000000e+00 : f32
    %188 = vector.broadcast %cst_41 : f32 to vector<8x192xf32>
    %189 = arith.addf %187, %188 : vector<8x192xf32>
    %cst_42 = arith.constant 5.000000e-01 : f32
    %190 = vector.broadcast %cst_42 : f32 to vector<8x192xf32>
    %191 = arith.mulf %190, %189 : vector<8x192xf32>
    %192 = vector.extract_strided_slice %183 {offsets = [0, 192], sizes = [8, 64], strides = [1, 1]} : vector<8x256xf32> to vector<8x64xf32>
    %193 = math.tanh %192 : vector<8x64xf32>
    %194 = vector.extract_strided_slice %191 {offsets = [0, 0], sizes = [8, 64], strides = [1, 1]} : vector<8x192xf32> to vector<8x64xf32>
    %195 = vector.extract_strided_slice %191 {offsets = [0, 64], sizes = [8, 64], strides = [1, 1]} : vector<8x192xf32> to vector<8x64xf32>
    %196 = vector.extract_strided_slice %191 {offsets = [0, 128], sizes = [8, 64], strides = [1, 1]} : vector<8x192xf32> to vector<8x64xf32>
    %197 = arith.mulf %195, %154 : vector<8x64xf32>
    %198 = arith.mulf %194, %193 : vector<8x64xf32>
    %199 = arith.addf %197, %198 : vector<8x64xf32>
    %200 = math.tanh %199 : vector<8x64xf32>
    %201 = arith.mulf %196, %200 : vector<8x64xf32>
    %202 = vector.extract_strided_slice %1 {offsets = [0, 4], sizes = [8, 1], strides = [1, 1]} : vector<8x9xbf16> to vector<8x1xbf16>
    %203 = arith.truncf %178 : vector<8x64xf32> to vector<8x64xbf16>
    %204 = tpu.concatenate %203, %202, %17 in 1 : vector<8x64xbf16>, vector<8x1xbf16>, vector<8x1xbf16> -> vector<8x66xbf16>
    %cst_43 = arith.constant dense<0.000000e+00> : vector<8x256xf32>
    %205 = tpu.matmul %204, %3, %cst_43 {dimension_numbers = #tpu.dot_dimension_numbers<[1], [0], [0], [1], [0, 0, 1, 1], [], []>} : vector<8x66xbf16>, vector<66x256xbf16>, vector<8x256xf32> -> vector<8x256xf32>
    %206 = vector.extract_strided_slice %205 {offsets = [0, 0], sizes = [8, 192], strides = [1, 1]} : vector<8x256xf32> to vector<8x192xf32>
    %cst_44 = arith.constant 5.000000e-01 : f32
    %207 = vector.broadcast %cst_44 : f32 to vector<8x192xf32>
    %208 = arith.mulf %207, %206 : vector<8x192xf32>
    %209 = math.tanh %208 : vector<8x192xf32>
    %cst_45 = arith.constant 1.000000e+00 : f32
    %210 = vector.broadcast %cst_45 : f32 to vector<8x192xf32>
    %211 = arith.addf %209, %210 : vector<8x192xf32>
    %cst_46 = arith.constant 5.000000e-01 : f32
    %212 = vector.broadcast %cst_46 : f32 to vector<8x192xf32>
    %213 = arith.mulf %212, %211 : vector<8x192xf32>
    %214 = vector.extract_strided_slice %205 {offsets = [0, 192], sizes = [8, 64], strides = [1, 1]} : vector<8x256xf32> to vector<8x64xf32>
    %215 = math.tanh %214 : vector<8x64xf32>
    %216 = vector.extract_strided_slice %213 {offsets = [0, 0], sizes = [8, 64], strides = [1, 1]} : vector<8x192xf32> to vector<8x64xf32>
    %217 = vector.extract_strided_slice %213 {offsets = [0, 64], sizes = [8, 64], strides = [1, 1]} : vector<8x192xf32> to vector<8x64xf32>
    %218 = vector.extract_strided_slice %213 {offsets = [0, 128], sizes = [8, 64], strides = [1, 1]} : vector<8x192xf32> to vector<8x64xf32>
    %219 = arith.mulf %217, %176 : vector<8x64xf32>
    %220 = arith.mulf %216, %215 : vector<8x64xf32>
    %221 = arith.addf %219, %220 : vector<8x64xf32>
    %222 = math.tanh %221 : vector<8x64xf32>
    %223 = arith.mulf %218, %222 : vector<8x64xf32>
    %224 = tpu.concatenate %223, %201 in 1 : vector<8x64xf32>, vector<8x64xf32> -> vector<8x128xf32>
    %225 = arith.truncf %224 : vector<8x128xf32> to vector<8x128xbf16>
    %cst_47 = arith.constant dense<0.000000e+00> : vector<8x256xf32>
    %226 = tpu.matmul %225, %4, %cst_47 {dimension_numbers = #tpu.dot_dimension_numbers<[1], [0], [0], [1], [0, 0, 1, 1], [], []>} : vector<8x128xbf16>, vector<128x256xbf16>, vector<8x256xf32> -> vector<8x256xf32>
    %227 = vector.broadcast %9 : vector<1x256xf32> to vector<8x256xf32>
    %228 = arith.addf %226, %227 : vector<8x256xf32>
    %229 = vector.extract_strided_slice %228 {offsets = [0, 0], sizes = [8, 192], strides = [1, 1]} : vector<8x256xf32> to vector<8x192xf32>
    %cst_48 = arith.constant 5.000000e-01 : f32
    %230 = vector.broadcast %cst_48 : f32 to vector<8x192xf32>
    %231 = arith.mulf %230, %229 : vector<8x192xf32>
    %232 = math.tanh %231 : vector<8x192xf32>
    %cst_49 = arith.constant 1.000000e+00 : f32
    %233 = vector.broadcast %cst_49 : f32 to vector<8x192xf32>
    %234 = arith.addf %232, %233 : vector<8x192xf32>
    %cst_50 = arith.constant 5.000000e-01 : f32
    %235 = vector.broadcast %cst_50 : f32 to vector<8x192xf32>
    %236 = arith.mulf %235, %234 : vector<8x192xf32>
    %237 = vector.extract_strided_slice %228 {offsets = [0, 192], sizes = [8, 64], strides = [1, 1]} : vector<8x256xf32> to vector<8x64xf32>
    %238 = math.tanh %237 : vector<8x64xf32>
    %239 = vector.extract_strided_slice %236 {offsets = [0, 0], sizes = [8, 64], strides = [1, 1]} : vector<8x192xf32> to vector<8x64xf32>
    %240 = vector.extract_strided_slice %236 {offsets = [0, 64], sizes = [8, 64], strides = [1, 1]} : vector<8x192xf32> to vector<8x64xf32>
    %241 = vector.extract_strided_slice %236 {offsets = [0, 128], sizes = [8, 64], strides = [1, 1]} : vector<8x192xf32> to vector<8x64xf32>
    %242 = arith.mulf %240, %199 : vector<8x64xf32>
    %243 = arith.mulf %239, %238 : vector<8x64xf32>
    %244 = arith.addf %242, %243 : vector<8x64xf32>
    %245 = math.tanh %244 : vector<8x64xf32>
    %246 = arith.mulf %241, %245 : vector<8x64xf32>
    %247 = vector.extract_strided_slice %1 {offsets = [0, 5], sizes = [8, 1], strides = [1, 1]} : vector<8x9xbf16> to vector<8x1xbf16>
    %248 = arith.truncf %223 : vector<8x64xf32> to vector<8x64xbf16>
    %249 = tpu.concatenate %248, %247, %17 in 1 : vector<8x64xbf16>, vector<8x1xbf16>, vector<8x1xbf16> -> vector<8x66xbf16>
    %cst_51 = arith.constant dense<0.000000e+00> : vector<8x256xf32>
    %250 = tpu.matmul %249, %3, %cst_51 {dimension_numbers = #tpu.dot_dimension_numbers<[1], [0], [0], [1], [0, 0, 1, 1], [], []>} : vector<8x66xbf16>, vector<66x256xbf16>, vector<8x256xf32> -> vector<8x256xf32>
    %251 = vector.extract_strided_slice %250 {offsets = [0, 0], sizes = [8, 192], strides = [1, 1]} : vector<8x256xf32> to vector<8x192xf32>
    %cst_52 = arith.constant 5.000000e-01 : f32
    %252 = vector.broadcast %cst_52 : f32 to vector<8x192xf32>
    %253 = arith.mulf %252, %251 : vector<8x192xf32>
    %254 = math.tanh %253 : vector<8x192xf32>
    %cst_53 = arith.constant 1.000000e+00 : f32
    %255 = vector.broadcast %cst_53 : f32 to vector<8x192xf32>
    %256 = arith.addf %254, %255 : vector<8x192xf32>
    %cst_54 = arith.constant 5.000000e-01 : f32
    %257 = vector.broadcast %cst_54 : f32 to vector<8x192xf32>
    %258 = arith.mulf %257, %256 : vector<8x192xf32>
    %259 = vector.extract_strided_slice %250 {offsets = [0, 192], sizes = [8, 64], strides = [1, 1]} : vector<8x256xf32> to vector<8x64xf32>
    %260 = math.tanh %259 : vector<8x64xf32>
    %261 = vector.extract_strided_slice %258 {offsets = [0, 0], sizes = [8, 64], strides = [1, 1]} : vector<8x192xf32> to vector<8x64xf32>
    %262 = vector.extract_strided_slice %258 {offsets = [0, 64], sizes = [8, 64], strides = [1, 1]} : vector<8x192xf32> to vector<8x64xf32>
    %263 = vector.extract_strided_slice %258 {offsets = [0, 128], sizes = [8, 64], strides = [1, 1]} : vector<8x192xf32> to vector<8x64xf32>
    %264 = arith.mulf %262, %221 : vector<8x64xf32>
    %265 = arith.mulf %261, %260 : vector<8x64xf32>
    %266 = arith.addf %264, %265 : vector<8x64xf32>
    %267 = math.tanh %266 : vector<8x64xf32>
    %268 = arith.mulf %263, %267 : vector<8x64xf32>
    %269 = tpu.concatenate %268, %246 in 1 : vector<8x64xf32>, vector<8x64xf32> -> vector<8x128xf32>
    %270 = arith.truncf %269 : vector<8x128xf32> to vector<8x128xbf16>
    %cst_55 = arith.constant dense<0.000000e+00> : vector<8x256xf32>
    %271 = tpu.matmul %270, %4, %cst_55 {dimension_numbers = #tpu.dot_dimension_numbers<[1], [0], [0], [1], [0, 0, 1, 1], [], []>} : vector<8x128xbf16>, vector<128x256xbf16>, vector<8x256xf32> -> vector<8x256xf32>
    %272 = vector.broadcast %9 : vector<1x256xf32> to vector<8x256xf32>
    %273 = arith.addf %271, %272 : vector<8x256xf32>
    %274 = vector.extract_strided_slice %273 {offsets = [0, 0], sizes = [8, 192], strides = [1, 1]} : vector<8x256xf32> to vector<8x192xf32>
    %cst_56 = arith.constant 5.000000e-01 : f32
    %275 = vector.broadcast %cst_56 : f32 to vector<8x192xf32>
    %276 = arith.mulf %275, %274 : vector<8x192xf32>
    %277 = math.tanh %276 : vector<8x192xf32>
    %cst_57 = arith.constant 1.000000e+00 : f32
    %278 = vector.broadcast %cst_57 : f32 to vector<8x192xf32>
    %279 = arith.addf %277, %278 : vector<8x192xf32>
    %cst_58 = arith.constant 5.000000e-01 : f32
    %280 = vector.broadcast %cst_58 : f32 to vector<8x192xf32>
    %281 = arith.mulf %280, %279 : vector<8x192xf32>
    %282 = vector.extract_strided_slice %273 {offsets = [0, 192], sizes = [8, 64], strides = [1, 1]} : vector<8x256xf32> to vector<8x64xf32>
    %283 = math.tanh %282 : vector<8x64xf32>
    %284 = vector.extract_strided_slice %281 {offsets = [0, 0], sizes = [8, 64], strides = [1, 1]} : vector<8x192xf32> to vector<8x64xf32>
    %285 = vector.extract_strided_slice %281 {offsets = [0, 64], sizes = [8, 64], strides = [1, 1]} : vector<8x192xf32> to vector<8x64xf32>
    %286 = vector.extract_strided_slice %281 {offsets = [0, 128], sizes = [8, 64], strides = [1, 1]} : vector<8x192xf32> to vector<8x64xf32>
    %287 = arith.mulf %285, %244 : vector<8x64xf32>
    %288 = arith.mulf %284, %283 : vector<8x64xf32>
    %289 = arith.addf %287, %288 : vector<8x64xf32>
    %290 = math.tanh %289 : vector<8x64xf32>
    %291 = arith.mulf %286, %290 : vector<8x64xf32>
    %292 = vector.extract_strided_slice %1 {offsets = [0, 6], sizes = [8, 1], strides = [1, 1]} : vector<8x9xbf16> to vector<8x1xbf16>
    %293 = arith.truncf %268 : vector<8x64xf32> to vector<8x64xbf16>
    %294 = tpu.concatenate %293, %292, %17 in 1 : vector<8x64xbf16>, vector<8x1xbf16>, vector<8x1xbf16> -> vector<8x66xbf16>
    %cst_59 = arith.constant dense<0.000000e+00> : vector<8x256xf32>
    %295 = tpu.matmul %294, %3, %cst_59 {dimension_numbers = #tpu.dot_dimension_numbers<[1], [0], [0], [1], [0, 0, 1, 1], [], []>} : vector<8x66xbf16>, vector<66x256xbf16>, vector<8x256xf32> -> vector<8x256xf32>
    %296 = vector.extract_strided_slice %295 {offsets = [0, 0], sizes = [8, 192], strides = [1, 1]} : vector<8x256xf32> to vector<8x192xf32>
    %cst_60 = arith.constant 5.000000e-01 : f32
    %297 = vector.broadcast %cst_60 : f32 to vector<8x192xf32>
    %298 = arith.mulf %297, %296 : vector<8x192xf32>
    %299 = math.tanh %298 : vector<8x192xf32>
    %cst_61 = arith.constant 1.000000e+00 : f32
    %300 = vector.broadcast %cst_61 : f32 to vector<8x192xf32>
    %301 = arith.addf %299, %300 : vector<8x192xf32>
    %cst_62 = arith.constant 5.000000e-01 : f32
    %302 = vector.broadcast %cst_62 : f32 to vector<8x192xf32>
    %303 = arith.mulf %302, %301 : vector<8x192xf32>
    %304 = vector.extract_strided_slice %295 {offsets = [0, 192], sizes = [8, 64], strides = [1, 1]} : vector<8x256xf32> to vector<8x64xf32>
    %305 = math.tanh %304 : vector<8x64xf32>
    %306 = vector.extract_strided_slice %303 {offsets = [0, 0], sizes = [8, 64], strides = [1, 1]} : vector<8x192xf32> to vector<8x64xf32>
    %307 = vector.extract_strided_slice %303 {offsets = [0, 64], sizes = [8, 64], strides = [1, 1]} : vector<8x192xf32> to vector<8x64xf32>
    %308 = vector.extract_strided_slice %303 {offsets = [0, 128], sizes = [8, 64], strides = [1, 1]} : vector<8x192xf32> to vector<8x64xf32>
    %309 = arith.mulf %307, %266 : vector<8x64xf32>
    %310 = arith.mulf %306, %305 : vector<8x64xf32>
    %311 = arith.addf %309, %310 : vector<8x64xf32>
    %312 = math.tanh %311 : vector<8x64xf32>
    %313 = arith.mulf %308, %312 : vector<8x64xf32>
    %314 = tpu.concatenate %313, %291 in 1 : vector<8x64xf32>, vector<8x64xf32> -> vector<8x128xf32>
    %315 = arith.truncf %314 : vector<8x128xf32> to vector<8x128xbf16>
    %cst_63 = arith.constant dense<0.000000e+00> : vector<8x256xf32>
    %316 = tpu.matmul %315, %4, %cst_63 {dimension_numbers = #tpu.dot_dimension_numbers<[1], [0], [0], [1], [0, 0, 1, 1], [], []>} : vector<8x128xbf16>, vector<128x256xbf16>, vector<8x256xf32> -> vector<8x256xf32>
    %317 = vector.broadcast %9 : vector<1x256xf32> to vector<8x256xf32>
    %318 = arith.addf %316, %317 : vector<8x256xf32>
    %319 = vector.extract_strided_slice %318 {offsets = [0, 0], sizes = [8, 192], strides = [1, 1]} : vector<8x256xf32> to vector<8x192xf32>
    %cst_64 = arith.constant 5.000000e-01 : f32
    %320 = vector.broadcast %cst_64 : f32 to vector<8x192xf32>
    %321 = arith.mulf %320, %319 : vector<8x192xf32>
    %322 = math.tanh %321 : vector<8x192xf32>
    %cst_65 = arith.constant 1.000000e+00 : f32
    %323 = vector.broadcast %cst_65 : f32 to vector<8x192xf32>
    %324 = arith.addf %322, %323 : vector<8x192xf32>
    %cst_66 = arith.constant 5.000000e-01 : f32
    %325 = vector.broadcast %cst_66 : f32 to vector<8x192xf32>
    %326 = arith.mulf %325, %324 : vector<8x192xf32>
    %327 = vector.extract_strided_slice %318 {offsets = [0, 192], sizes = [8, 64], strides = [1, 1]} : vector<8x256xf32> to vector<8x64xf32>
    %328 = math.tanh %327 : vector<8x64xf32>
    %329 = vector.extract_strided_slice %326 {offsets = [0, 0], sizes = [8, 64], strides = [1, 1]} : vector<8x192xf32> to vector<8x64xf32>
    %330 = vector.extract_strided_slice %326 {offsets = [0, 64], sizes = [8, 64], strides = [1, 1]} : vector<8x192xf32> to vector<8x64xf32>
    %331 = vector.extract_strided_slice %326 {offsets = [0, 128], sizes = [8, 64], strides = [1, 1]} : vector<8x192xf32> to vector<8x64xf32>
    %332 = arith.mulf %330, %289 : vector<8x64xf32>
    %333 = arith.mulf %329, %328 : vector<8x64xf32>
    %334 = arith.addf %332, %333 : vector<8x64xf32>
    %335 = math.tanh %334 : vector<8x64xf32>
    %336 = arith.mulf %331, %335 : vector<8x64xf32>
    %337 = vector.extract_strided_slice %1 {offsets = [0, 7], sizes = [8, 1], strides = [1, 1]} : vector<8x9xbf16> to vector<8x1xbf16>
    %338 = arith.truncf %313 : vector<8x64xf32> to vector<8x64xbf16>
    %339 = tpu.concatenate %338, %337, %17 in 1 : vector<8x64xbf16>, vector<8x1xbf16>, vector<8x1xbf16> -> vector<8x66xbf16>
    %cst_67 = arith.constant dense<0.000000e+00> : vector<8x256xf32>
    %340 = tpu.matmul %339, %3, %cst_67 {dimension_numbers = #tpu.dot_dimension_numbers<[1], [0], [0], [1], [0, 0, 1, 1], [], []>} : vector<8x66xbf16>, vector<66x256xbf16>, vector<8x256xf32> -> vector<8x256xf32>
    %341 = vector.extract_strided_slice %340 {offsets = [0, 0], sizes = [8, 192], strides = [1, 1]} : vector<8x256xf32> to vector<8x192xf32>
    %cst_68 = arith.constant 5.000000e-01 : f32
    %342 = vector.broadcast %cst_68 : f32 to vector<8x192xf32>
    %343 = arith.mulf %342, %341 : vector<8x192xf32>
    %344 = math.tanh %343 : vector<8x192xf32>
    %cst_69 = arith.constant 1.000000e+00 : f32
    %345 = vector.broadcast %cst_69 : f32 to vector<8x192xf32>
    %346 = arith.addf %344, %345 : vector<8x192xf32>
    %cst_70 = arith.constant 5.000000e-01 : f32
    %347 = vector.broadcast %cst_70 : f32 to vector<8x192xf32>
    %348 = arith.mulf %347, %346 : vector<8x192xf32>
    %349 = vector.extract_strided_slice %340 {offsets = [0, 192], sizes = [8, 64], strides = [1, 1]} : vector<8x256xf32> to vector<8x64xf32>
    %350 = math.tanh %349 : vector<8x64xf32>
    %351 = vector.extract_strided_slice %348 {offsets = [0, 0], sizes = [8, 64], strides = [1, 1]} : vector<8x192xf32> to vector<8x64xf32>
    %352 = vector.extract_strided_slice %348 {offsets = [0, 64], sizes = [8, 64], strides = [1, 1]} : vector<8x192xf32> to vector<8x64xf32>
    %353 = vector.extract_strided_slice %348 {offsets = [0, 128], sizes = [8, 64], strides = [1, 1]} : vector<8x192xf32> to vector<8x64xf32>
    %354 = arith.mulf %352, %311 : vector<8x64xf32>
    %355 = arith.mulf %351, %350 : vector<8x64xf32>
    %356 = arith.addf %354, %355 : vector<8x64xf32>
    %357 = math.tanh %356 : vector<8x64xf32>
    %358 = arith.mulf %353, %357 : vector<8x64xf32>
    %359 = tpu.concatenate %358, %336 in 1 : vector<8x64xf32>, vector<8x64xf32> -> vector<8x128xf32>
    %360 = arith.truncf %359 : vector<8x128xf32> to vector<8x128xbf16>
    %cst_71 = arith.constant dense<0.000000e+00> : vector<8x256xf32>
    %361 = tpu.matmul %360, %4, %cst_71 {dimension_numbers = #tpu.dot_dimension_numbers<[1], [0], [0], [1], [0, 0, 1, 1], [], []>} : vector<8x128xbf16>, vector<128x256xbf16>, vector<8x256xf32> -> vector<8x256xf32>
    %362 = vector.broadcast %9 : vector<1x256xf32> to vector<8x256xf32>
    %363 = arith.addf %361, %362 : vector<8x256xf32>
    %364 = vector.extract_strided_slice %363 {offsets = [0, 0], sizes = [8, 192], strides = [1, 1]} : vector<8x256xf32> to vector<8x192xf32>
    %cst_72 = arith.constant 5.000000e-01 : f32
    %365 = vector.broadcast %cst_72 : f32 to vector<8x192xf32>
    %366 = arith.mulf %365, %364 : vector<8x192xf32>
    %367 = math.tanh %366 : vector<8x192xf32>
    %cst_73 = arith.constant 1.000000e+00 : f32
    %368 = vector.broadcast %cst_73 : f32 to vector<8x192xf32>
    %369 = arith.addf %367, %368 : vector<8x192xf32>
    %cst_74 = arith.constant 5.000000e-01 : f32
    %370 = vector.broadcast %cst_74 : f32 to vector<8x192xf32>
    %371 = arith.mulf %370, %369 : vector<8x192xf32>
    %372 = vector.extract_strided_slice %363 {offsets = [0, 192], sizes = [8, 64], strides = [1, 1]} : vector<8x256xf32> to vector<8x64xf32>
    %373 = math.tanh %372 : vector<8x64xf32>
    %374 = vector.extract_strided_slice %371 {offsets = [0, 0], sizes = [8, 64], strides = [1, 1]} : vector<8x192xf32> to vector<8x64xf32>
    %375 = vector.extract_strided_slice %371 {offsets = [0, 64], sizes = [8, 64], strides = [1, 1]} : vector<8x192xf32> to vector<8x64xf32>
    %376 = vector.extract_strided_slice %371 {offsets = [0, 128], sizes = [8, 64], strides = [1, 1]} : vector<8x192xf32> to vector<8x64xf32>
    %377 = arith.mulf %375, %334 : vector<8x64xf32>
    %378 = arith.mulf %374, %373 : vector<8x64xf32>
    %379 = arith.addf %377, %378 : vector<8x64xf32>
    %380 = math.tanh %379 : vector<8x64xf32>
    %381 = arith.mulf %376, %380 : vector<8x64xf32>
    %382 = vector.extract_strided_slice %0 {offsets = [0, 7], sizes = [8, 1], strides = [1, 1]} : vector<8x9xf32> to vector<8x1xf32>
    %383 = tpu.concatenate %358, %381 in 1 : vector<8x64xf32>, vector<8x64xf32> -> vector<8x128xf32>
    %384 = vector.broadcast %11 : vector<1x1xf32> to vector<8x1xf32>
    %385 = arith.mulf %382, %384 : vector<8x1xf32>
    %386 = vector.broadcast %10 : vector<1x128xf32> to vector<8x128xf32>
    %387 = arith.mulf %383, %386 : vector<8x128xf32>
    %cst_75 = arith.constant dense<0.000000e+00> : vector<8xf32>
    %388 = vector.multi_reduction <add>, %387, %cst_75 [1] : vector<8x128xf32> to vector<8xf32>
    %389 = vector.shape_cast %388 : vector<8xf32> to vector<8x1xf32>
    %390 = arith.addf %385, %389 : vector<8x1xf32>
    %391 = vector.broadcast %12 : vector<1x1xf32> to vector<8x1xf32>
    %392 = arith.addf %390, %391 : vector<8x1xf32>
    %393 = arith.truncf %358 : vector<8x64xf32> to vector<8x64xbf16>
    %394 = arith.truncf %392 : vector<8x1xf32> to vector<8x1xbf16>
    %395 = tpu.concatenate %393, %394, %17 in 1 : vector<8x64xbf16>, vector<8x1xbf16>, vector<8x1xbf16> -> vector<8x66xbf16>
    %cst_76 = arith.constant dense<0.000000e+00> : vector<8x256xf32>
    %396 = tpu.matmul %395, %3, %cst_76 {dimension_numbers = #tpu.dot_dimension_numbers<[1], [0], [0], [1], [0, 0, 1, 1], [], []>} : vector<8x66xbf16>, vector<66x256xbf16>, vector<8x256xf32> -> vector<8x256xf32>
    %397 = vector.extract_strided_slice %396 {offsets = [0, 0], sizes = [8, 192], strides = [1, 1]} : vector<8x256xf32> to vector<8x192xf32>
    %cst_77 = arith.constant 5.000000e-01 : f32
    %398 = vector.broadcast %cst_77 : f32 to vector<8x192xf32>
    %399 = arith.mulf %398, %397 : vector<8x192xf32>
    %400 = math.tanh %399 : vector<8x192xf32>
    %cst_78 = arith.constant 1.000000e+00 : f32
    %401 = vector.broadcast %cst_78 : f32 to vector<8x192xf32>
    %402 = arith.addf %400, %401 : vector<8x192xf32>
    %cst_79 = arith.constant 5.000000e-01 : f32
    %403 = vector.broadcast %cst_79 : f32 to vector<8x192xf32>
    %404 = arith.mulf %403, %402 : vector<8x192xf32>
    %405 = vector.extract_strided_slice %396 {offsets = [0, 192], sizes = [8, 64], strides = [1, 1]} : vector<8x256xf32> to vector<8x64xf32>
    %406 = math.tanh %405 : vector<8x64xf32>
    %407 = vector.extract_strided_slice %404 {offsets = [0, 0], sizes = [8, 64], strides = [1, 1]} : vector<8x192xf32> to vector<8x64xf32>
    %408 = vector.extract_strided_slice %404 {offsets = [0, 64], sizes = [8, 64], strides = [1, 1]} : vector<8x192xf32> to vector<8x64xf32>
    %409 = vector.extract_strided_slice %404 {offsets = [0, 128], sizes = [8, 64], strides = [1, 1]} : vector<8x192xf32> to vector<8x64xf32>
    %410 = arith.mulf %408, %356 : vector<8x64xf32>
    %411 = arith.mulf %407, %406 : vector<8x64xf32>
    %412 = arith.addf %410, %411 : vector<8x64xf32>
    %413 = math.tanh %412 : vector<8x64xf32>
    %414 = arith.mulf %409, %413 : vector<8x64xf32>
    %415 = tpu.concatenate %414, %381 in 1 : vector<8x64xf32>, vector<8x64xf32> -> vector<8x128xf32>
    %416 = arith.truncf %415 : vector<8x128xf32> to vector<8x128xbf16>
    %cst_80 = arith.constant dense<0.000000e+00> : vector<8x256xf32>
    %417 = tpu.matmul %416, %4, %cst_80 {dimension_numbers = #tpu.dot_dimension_numbers<[1], [0], [0], [1], [0, 0, 1, 1], [], []>} : vector<8x128xbf16>, vector<128x256xbf16>, vector<8x256xf32> -> vector<8x256xf32>
    %418 = vector.broadcast %9 : vector<1x256xf32> to vector<8x256xf32>
    %419 = arith.addf %417, %418 : vector<8x256xf32>
    %420 = vector.extract_strided_slice %419 {offsets = [0, 0], sizes = [8, 192], strides = [1, 1]} : vector<8x256xf32> to vector<8x192xf32>
    %cst_81 = arith.constant 5.000000e-01 : f32
    %421 = vector.broadcast %cst_81 : f32 to vector<8x192xf32>
    %422 = arith.mulf %421, %420 : vector<8x192xf32>
    %423 = math.tanh %422 : vector<8x192xf32>
    %cst_82 = arith.constant 1.000000e+00 : f32
    %424 = vector.broadcast %cst_82 : f32 to vector<8x192xf32>
    %425 = arith.addf %423, %424 : vector<8x192xf32>
    %cst_83 = arith.constant 5.000000e-01 : f32
    %426 = vector.broadcast %cst_83 : f32 to vector<8x192xf32>
    %427 = arith.mulf %426, %425 : vector<8x192xf32>
    %428 = vector.extract_strided_slice %419 {offsets = [0, 192], sizes = [8, 64], strides = [1, 1]} : vector<8x256xf32> to vector<8x64xf32>
    %429 = math.tanh %428 : vector<8x64xf32>
    %430 = vector.extract_strided_slice %427 {offsets = [0, 0], sizes = [8, 64], strides = [1, 1]} : vector<8x192xf32> to vector<8x64xf32>
    %431 = vector.extract_strided_slice %427 {offsets = [0, 64], sizes = [8, 64], strides = [1, 1]} : vector<8x192xf32> to vector<8x64xf32>
    %432 = vector.extract_strided_slice %427 {offsets = [0, 128], sizes = [8, 64], strides = [1, 1]} : vector<8x192xf32> to vector<8x64xf32>
    %433 = arith.mulf %431, %379 : vector<8x64xf32>
    %434 = arith.mulf %430, %429 : vector<8x64xf32>
    %435 = arith.addf %433, %434 : vector<8x64xf32>
    %436 = math.tanh %435 : vector<8x64xf32>
    %437 = arith.mulf %432, %436 : vector<8x64xf32>
    %438 = tpu.concatenate %414, %437 in 1 : vector<8x64xf32>, vector<8x64xf32> -> vector<8x128xf32>
    %439 = vector.broadcast %11 : vector<1x1xf32> to vector<8x1xf32>
    %440 = arith.mulf %392, %439 : vector<8x1xf32>
    %441 = vector.broadcast %10 : vector<1x128xf32> to vector<8x128xf32>
    %442 = arith.mulf %438, %441 : vector<8x128xf32>
    %cst_84 = arith.constant dense<0.000000e+00> : vector<8xf32>
    %443 = vector.multi_reduction <add>, %442, %cst_84 [1] : vector<8x128xf32> to vector<8xf32>
    %444 = vector.shape_cast %443 : vector<8xf32> to vector<8x1xf32>
    %445 = arith.addf %440, %444 : vector<8x1xf32>
    %446 = vector.broadcast %12 : vector<1x1xf32> to vector<8x1xf32>
    %447 = arith.addf %445, %446 : vector<8x1xf32>
    %cst_85 = arith.constant dense<0.000000e+00> : vector<8x64xf32>
    %448 = tpu.matmul %1, %6, %cst_85 {dimension_numbers = #tpu.dot_dimension_numbers<[1], [0], [0], [1], [0, 0, 1, 1], [], []>} : vector<8x9xbf16>, vector<9x64xbf16>, vector<8x64xf32> -> vector<8x64xf32>
    %449 = vector.broadcast %14 : vector<1x64xf32> to vector<8x64xf32>
    %450 = arith.addf %448, %449 : vector<8x64xf32>
    %cst_86 = arith.constant 0.000000e+00 : f32
    %451 = vector.broadcast %cst_86 : f32 to vector<8x64xf32>
    %452 = arith.maximumf %450, %451 : vector<8x64xf32>
    %453 = arith.truncf %452 : vector<8x64xf32> to vector<8x64xbf16>
    %cst_87 = arith.constant dense<0.000000e+00> : vector<8x64xf32>
    %454 = tpu.matmul %453, %7, %cst_87 {dimension_numbers = #tpu.dot_dimension_numbers<[1], [0], [0], [1], [0, 0, 1, 1], [], []>} : vector<8x64xbf16>, vector<64x64xbf16>, vector<8x64xf32> -> vector<8x64xf32>
    %455 = vector.broadcast %15 : vector<1x64xf32> to vector<8x64xf32>
    %456 = arith.addf %454, %455 : vector<8x64xf32>
    %cst_88 = arith.constant 0.000000e+00 : f32
    %457 = vector.broadcast %cst_88 : f32 to vector<8x64xf32>
    %458 = arith.maximumf %456, %457 : vector<8x64xf32>
    %459 = vector.shape_cast %447 : vector<8x1xf32> to vector<8x1xf32>
    %460 = vector.broadcast %459 : vector<8x1xf32> to vector<8x64xf32>
    %461 = tpu.concatenate %458, %460 in 1 : vector<8x64xf32>, vector<8x64xf32> -> vector<8x128xf32>
    %462 = tpu.transpose %461, [1, 0] : vector<8x128xf32> -> vector<128x8xf32>
    %463 = vector.extract_strided_slice %462 {offsets = [0, 0], sizes = [64, 8], strides = [1, 1]} : vector<128x8xf32> to vector<64x8xf32>
    %cst_89 = arith.constant dense<0.000000e+00> : vector<1x8xf32>
    %464 = tpu.matmul %16, %463, %cst_89 {dimension_numbers = #tpu.dot_dimension_numbers<[1], [0], [0], [1], [0, 0, 1, 1], [], []>} : vector<1x64xf32>, vector<64x8xf32>, vector<1x8xf32> -> vector<1x8xf32>
    %465 = vector.broadcast %13 : vector<1x1xf32> to vector<1x8xf32>
    %466 = arith.addf %464, %465 : vector<1x8xf32>
    %cst_90 = arith.constant 5.000000e-01 : f32
    %467 = vector.broadcast %cst_90 : f32 to vector<1x8xf32>
    %468 = arith.mulf %467, %466 : vector<1x8xf32>
    %469 = math.tanh %468 : vector<1x8xf32>
    %cst_91 = arith.constant 1.000000e+00 : f32
    %470 = vector.broadcast %cst_91 : f32 to vector<1x8xf32>
    %471 = arith.addf %469, %470 : vector<1x8xf32>
    %cst_92 = arith.constant 5.000000e-01 : f32
    %472 = vector.broadcast %cst_92 : f32 to vector<1x8xf32>
    %473 = arith.mulf %472, %471 : vector<1x8xf32>
    %474 = vector.extract_strided_slice %462 {offsets = [64, 0], sizes = [1, 8], strides = [1, 1]} : vector<128x8xf32> to vector<1x8xf32>
    %475 = arith.mulf %474, %473 : vector<1x8xf32>
    %c0_93 = arith.constant 0 : index
    %c0_94 = arith.constant 0 : index
    %476 = vector.load %arg5[%c0_93, %c0_94] : memref<1x8xf32, #tpu.memory_space<vmem>>, vector<1x8xf32>
    tpu.vector_store %arg5[%c0_93, %c0_94], %475 {strides = array<i32>} : memref<1x8xf32, #tpu.memory_space<vmem>>, vector<1x8xf32>,
    return
  }
  func.func @transform_0(%arg0: i32) -> (i32, i32) {
    %c0_i32 = arith.constant 0 : i32
    %c0_i32_0 = arith.constant 0 : i32
    return %arg0, %c0_i32 : i32, i32
  }
  func.func @transform_1(%arg0: i32) -> (i32, i32) {
    %c0_i32 = arith.constant 0 : i32
    %c0_i32_0 = arith.constant 0 : i32
    %c0_i32_1 = arith.constant 0 : i32
    return %c0_i32, %c0_i32_0 : i32, i32
  }
  func.func @transform_2(%arg0: i32) -> (i32, i32) {
    %c0_i32 = arith.constant 0 : i32
    %c0_i32_0 = arith.constant 0 : i32
    %c0_i32_1 = arith.constant 0 : i32
    return %c0_i32, %c0_i32_0 : i32, i32
  }
  func.func @transform_3(%arg0: i32) -> (i32, i32) {
    %c0_i32 = arith.constant 0 : i32
    %c0_i32_0 = arith.constant 0 : i32
    %c0_i32_1 = arith.constant 0 : i32
    return %c0_i32, %c0_i32_0 : i32, i32
  }
  func.func @transform_4(%arg0: i32) -> (i32, i32) {
    %c0_i32 = arith.constant 0 : i32
    %c0_i32_0 = arith.constant 0 : i32
    return %c0_i32, %arg0 : i32, i32
  }
}

</mosaic_0001>

<llo_original>
// kernel: gate_sequence_forward.1
$region0: #{gate_sequence_forward.1}
  #allocation0 [shape = 'u32[]', space=smem, size = 0x4, offset = 0x4, fixed_abs, tag = 'smem constant byte address 0x4 - core index']
  #allocation1 [shape = 'u32[144,128]{1,0:T(1,128)}', space=vmem, size = 0x12000, scoped, tag = 'internal scratch']
  %s0 = inlined_call_operand.hbm [shape: f32[8,9], index: 0, kind: input, shape index: {}]
  %s1 = inlined_call_operand.hbm [shape: bf16[208,256], index: 1, kind: input, shape index: {}]
  %s2 = inlined_call_operand.hbm [shape: bf16[64,128], index: 2, kind: input, shape index: {}]
  %s3 = inlined_call_operand.hbm [shape: f32[8,256], index: 3, kind: input, shape index: {}]
  %s4 = inlined_call_operand.hbm [shape: f32[1,8], index: 4, kind: output, shape index: {}]
  %s5 = sld [smem:[#allocation0]]
  $region42: #{gate_sequence_forward.1} parent=0
    _
  %s7 = ssub.s32 1, %s5
  %s8 = scalar_select 0, %s7, %s5
  $region1: #{gate_sequence_forward.1} parent=0
    #allocation2 [shape = 'u8[4096]{0}', space=vmem, size = 0x1000, scoped, tag = 'input window, operand 0, single buffered']
    #allocation3 [shape = 's32[1]{0}', space=sflag, size = 0x4, scoped, tag = 'scoped memory for gate_sequence_forward.1']
    #allocation4 [shape = 's32[1]{0}', space=sflag, size = 0x4, scoped, tag = 'scoped memory for gate_sequence_forward.1']
    #allocation5 [shape = 'u8[106496]{0}', space=vmem, size = 0x1a000, scoped, tag = 'input window, operand 1, single buffered']
    #allocation6 [shape = 's32[1]{0}', space=sflag, size = 0x4, scoped, tag = 'scoped memory for gate_sequence_forward.1']
    #allocation7 [shape = 'u8[16384]{0}', space=vmem, size = 0x4000, scoped, tag = 'input window, operand 2, single buffered']
    #allocation8 [shape = 'u8[8192]{0}', space=vmem, size = 0x2000, scoped, tag = 'input window, operand 3, single buffered']
    #allocation9 [shape = 's32[1]{0}', space=sflag, size = 0x4, scoped, tag = 'scoped memory for gate_sequence_forward.1']
    #allocation10 [shape = 'u8[512]{0}', space=vmem, size = 0x400, scoped, tag = 'output window, operand 0, single buffered']
    %9 = vsyncpa [#allocation3], 0
    %10 = vsyncpa [#allocation6], 0
    %11 = vsyncpa [#allocation9], 0
    %12 = vsyncpa [#allocation4], 0
    // Predicated region
    $region2: #{gate_sequence_forward.1} parent=1 // pred_check
      _
    $region3: #{gate_sequence_forward.1} parent=1 // pred_check_branch
      %14 = sbr.rel (0) target = $region5
    $region4: #{gate_sequence_forward.1} parent=1 // pred_region
      %s16 = ssub.s32 128, 128
      %17 = vsyncadd [#allocation3], %s16
      %s19 = sshll.u32 [#allocation2], 4
      %s20 = int_to_ptr.vmem [resolvable:$true] %s19
      %22 = dma.hbm_to_vmem [thread:$0]  %s0, 128, %s20, [#allocation3]
    $region5: #{gate_sequence_forward.1} parent=1 // pred_fallthru
      _
    // Predicated region
    $region6: #{gate_sequence_forward.1} parent=1 // pred_check
      _
    $region7: #{gate_sequence_forward.1} parent=1 // pred_check_branch
      %24 = sbr.rel (0) target = $region9
    $region8: #{gate_sequence_forward.1} parent=1 // pred_region
      %s26 = ssub.s32 3328, 3328
      %27 = vsyncadd [#allocation6], %s26
      %s28 = sshll.u32 [#allocation5], 4
      %s29 = int_to_ptr.vmem [resolvable:$true] %s28
      %34 = dma.hbm_to_vmem [thread:$0]  %s1, 3328, %s29, [#allocation6], 128, 128, 8
    $region9: #{gate_sequence_forward.1} parent=1 // pred_fallthru
      _
    // Predicated region
    $region10: #{gate_sequence_forward.1} parent=1 // pred_check
      _
    $region11: #{gate_sequence_forward.1} parent=1 // pred_check_branch
      %36 = sbr.rel (0) target = $region13
    $region12: #{gate_sequence_forward.1} parent=1 // pred_region
      %s38 = ssub.s32 512, 512
      %39 = vsyncadd [#allocation6], %s38
      %s40 = sshll.u32 [#allocation7], 4
      %s41 = int_to_ptr.vmem [resolvable:$true] %s40
      %46 = dma.hbm_to_vmem [thread:$0]  %s2, 512, %s41, [#allocation6], 64, 64, 4
    $region13: #{gate_sequence_forward.1} parent=1 // pred_fallthru
      _
    // Predicated region
    $region14: #{gate_sequence_forward.1} parent=1 // pred_check
      _
    $region15: #{gate_sequence_forward.1} parent=1 // pred_check_branch
      %48 = sbr.rel (0) target = $region17
    $region16: #{gate_sequence_forward.1} parent=1 // pred_region
      %s50 = ssub.s32 256, 256
      %51 = vsyncadd [#allocation9], %s50
      %s53 = sshll.u32 [#allocation8], 4
      %s54 = int_to_ptr.vmem [resolvable:$true] %s53
      %56 = dma.hbm_to_vmem [thread:$0]  %s3, 256, %s54, [#allocation9]
    $region17: #{gate_sequence_forward.1} parent=1 // pred_fallthru
      _
    // Predicated region
    $region18: #{gate_sequence_forward.1} parent=1 // pred_check
      _
    $region19: #{gate_sequence_forward.1} parent=1 // pred_check_branch
      %58 = sbr.rel (0) target = $region21
    $region20: #{gate_sequence_forward.1} parent=1 // pred_region
      %59 = dma.done [#allocation3], 128
    $region21: #{gate_sequence_forward.1} parent=1 // pred_fallthru
      _
    // Predicated region
    $region22: #{gate_sequence_forward.1} parent=1 // pred_check
      _
    $region23: #{gate_sequence_forward.1} parent=1 // pred_check_branch
      %61 = sbr.rel (0) target = $region25
    $region24: #{gate_sequence_forward.1} parent=1 // pred_region
      %62 = dma.done [#allocation6], 3328
    $region25: #{gate_sequence_forward.1} parent=1 // pred_fallthru
      _
    // Predicated region
    $region26: #{gate_sequence_forward.1} parent=1 // pred_check
      _
    $region27: #{gate_sequence_forward.1} parent=1 // pred_check_branch
      %64 = sbr.rel (0) target = $region29
    $region28: #{gate_sequence_forward.1} parent=1 // pred_region
      %65 = dma.done [#allocation6], 512
    $region29: #{gate_sequence_forward.1} parent=1 // pred_fallthru
      _
    // Predicated region
    $region30: #{gate_sequence_forward.1} parent=1 // pred_check
      _
    $region31: #{gate_sequence_forward.1} parent=1 // pred_check_branch
      %67 = sbr.rel (0) target = $region33
    $region32: #{gate_sequence_forward.1} parent=1 // pred_region
      %68 = dma.done [#allocation9], 256
    $region33: #{gate_sequence_forward.1} parent=1 // pred_fallthru
      _
    %v71 = vld [vmem:[#allocation2] sm:$0xff]
    %v72 = vpack.c.bf16 %v71, %v71
    %v73 = vld [vmem:[#allocation5] sm:$0xff]
    %v74 = vld [vmem:[#allocation5 + $0x8] sm:$0xff]
    %v75 = vld [vmem:[#allocation5 + $0x10] sm:$0xff]
    %v76 = vld [vmem:[#allocation5 + $0x18] sm:$0xff]
    %v77 = vld [vmem:[#allocation5 + $0x20] sm:$0xff]
    %v78 = vld [vmem:[#allocation5 + $0x28] sm:$0xff]
    %v79 = vld [vmem:[#allocation5 + $0x30] sm:$0xff]
    %v80 = vld [vmem:[#allocation5 + $0x38] sm:$0xff]
    %v81 = vld [vmem:[#allocation5 + $0x40] sm:$0xff]
    %v82 = vld [vmem:[#allocation5 + $0x50] sm:$0xff]
    %v83 = vld [vmem:[#allocation5 + $0x58] sm:$0xff]
    %v84 = vld [vmem:[#allocation5 + $0x60] sm:$0xff]
    %v85 = vld [vmem:[#allocation5 + $0x68] sm:$0xff]
    %v86 = vld [vmem:[#allocation5 + $0x70] sm:$0xff]
    %v87 = vld [vmem:[#allocation5 + $0x78] sm:$0xff]
    %v88 = vld [vmem:[#allocation5 + $0x80] sm:$0xff]
    %v89 = vld [vmem:[#allocation5 + $0x88] sm:$0xff]
    %v90 = vld [vmem:[#allocation5 + $0x90] sm:$0xff]
    %v91 = vld [vmem:[#allocation5 + $0x98] sm:$0xff]
    %v92 = vld [vmem:[#allocation5 + $0xa0] sm:$0xff]
    %v93 = vld [vmem:[#allocation5 + $0xa8] sm:$0xff]
    %v94 = vld [vmem:[#allocation5 + $0xb0] sm:$0xff]
    %v95 = vld [vmem:[#allocation5 + $0xb8] sm:$0xff]
    %v96 = vld [vmem:[#allocation5 + $0xc0] sm:$0xff]
    %v97 = vld [vmem:[#allocation5 + $0xc8] sm:$0xff]
    %v98 = vld [vmem:[#allocation7] sm:$0xf]
    %v99 = vld [vmem:[#allocation7 + $0x4] sm:$0xf]
    %v100 = vld [vmem:[#allocation7 + $0x8] sm:$0xf]
    %v101 = vld [vmem:[#allocation7 + $0xc] sm:$0xf]
    %v102 = vld [vmem:[#allocation7 + $0x10] sm:$0xf]
    %v103 = vld [vmem:[#allocation7 + $0x14] sm:$0xf]
    %v104 = vld [vmem:[#allocation7 + $0x18] sm:$0xf]
    %v105 = vld [vmem:[#allocation7 + $0x1c] sm:$0xf]
    %v106 = vld [vmem:[#allocation8] sm:$0xff]
    %v107 = vld [vmem:[#allocation8 + $0x8] sm:$0xff]
    %109 = vrot.lane.b32.xlu0 %v72, 64
    %v110 = vpop.permute.xlu0 %109
    %vm111 = vcmask 523264
    %v114 = vsel %vm111, 0, %v110
    %vm115 = vcmask 531456
    %v117 = vsel %vm115, %v114, 1065369472
    %v127 = vunpack.c.l.b16 %v73
    %v128 = vunpack.c.h.b16 %v73
    %v129 = vunpack.c.l.b16 %v74
    %v130 = vunpack.c.h.b16 %v74
    %v131 = vunpack.c.l.b16 %v75
    %v132 = vunpack.c.h.b16 %v75
    %v133 = vunpack.c.l.b16 %v76
    %v134 = vunpack.c.h.b16 %v76
    %v135 = vunpack.c.l.b16 %v77
    %v136 = vunpack.c.h.b16 %v77
    %v137 = vunpack.c.l.b16 %v78
    %v138 = vunpack.c.h.b16 %v78
    %v139 = vunpack.c.l.b16 %v79
    %v140 = vunpack.c.h.b16 %v79
    %v141 = vunpack.c.l.b16 %v80
    %v142 = vunpack.c.h.b16 %v80
    %v143 = vunpack.c.l.b16 %v81
    %v144 = vunpack.c.h.b16 %v81
    %v145 = vpack.c.b16 %v129, %v127
    %v146 = vpack.c.b16 %v130, %v128
    %v147 = vpack.c.b16 %v133, %v131
    %v148 = vpack.c.b16 %v134, %v132
    %v149 = vpack.c.b16 %v137, %v135
    %v150 = vpack.c.b16 %v138, %v136
    %v151 = vpack.c.b16 %v141, %v139
    %v152 = vpack.c.b16 %v142, %v140
    %v153 = vpack.c.b16 %v143, %v143
    %v154 = vpack.c.b16 %v144, %v144
    %vm163 = vcmask 539648
    %v164 = vsel %vm163, %v117, 0
    %vm166 = vcmask 1040384
    %v168 = vsel %vm166, %v153, 0
    %v171 = vsel %vm166, %v154, 0
    %173 = vmatprep.subr.bf16.mxu0 %v146
    %174 = vmatpush1.bf16.msra.mxu0 %v145
    %175 = vmatprep.subr.bf16.mxu0 %v148
    %176 = vmatpush1.bf16.msra.mxu0 %v147
    %177 = vmatprep.subr.bf16.mxu0 %v150
    %178 = vmatpush1.bf16.msra.mxu0 %v149
    %179 = vmatprep.subr.bf16.mxu0 %v152
    %180 = vmatpush1.bf16.msra.mxu0 %v151
    %181 = vmatprep.subr.bf16.mxu0 %v171
    %182 = vmatpush1.bf16.msra.mxu0 %v168
    %183 = vmatprep.subr.bf16.mxu0 0
    %184 = vmatpush1.bf16.msra.mxu0 0
    %185 = vmatprep.subr.bf16.mxu0 0
    %186 = vmatpush1.bf16.msra.mxu0 0
    %187 = vmatprep.subr.bf16.mxu0 0
    %188 = vmatpush1.bf16.msra.mxu0 0
    %189 = vmatprep.subr.bf16.mxu0 0
    %190 = vmatpush1.bf16.msra.mxu0 0
    %191 = vmatprep.subr.bf16.mxu0 0
    %192 = vmatpush1.bf16.msra.mxu0 0
    %193 = vmatprep.subr.bf16.mxu0 0
    %194 = vmatpush1.bf16.msra.mxu0 0
    %195 = vmatprep.subr.bf16.mxu0 0
    %196 = vmatpush1.bf16.msra.mxu0 0
    %197 = vmatprep.subr.bf16.mxu0 0
    %198 = vmatpush1.bf16.msra.mxu0 0
    %199 = vmatprep.subr.bf16.mxu0 0
    %200 = vmatpush1.bf16.msra.mxu0 0
    %201 = vmatprep.subr.bf16.mxu0 0
    %202 = vmatpush1.bf16.msra.mxu0 0
    %203 = vmatprep.subr.bf16.mxu0 0
    %204 = vmatpush1.bf16.msra.mxu0 0
    %205 = vmatprep.mubr.bf16.mxu0 0
    %206 = vmatmul.mubr.bf16.gmra.mrb[0].mxu0 %v164
    %v207 = vpop.f32.mrb[0].mxu0
    %v208 = vadd.f32 0.0, %v207
    %v209 = vpop.f32.mrb[0].mxu0
    %v210 = vadd.f32 0.0, %v209
    %v211 = vpop.f32.mrb[0].mxu0
    %v212 = vpop.f32.mrb[0].mxu0
    %213 = vdwg.mxu0
    %v214 = vmul.f32 %v208, 0.5
    %v215 = vmul.f32 %v210, 0.5
    %v216 = vtanh.pop %v214
    %v217 = vtanh.pop %v215
    %v218 = vadd.f32 %v216, 1.0
    %v219 = vadd.f32 %v217, 1.0
    %v220 = vmul.f32 %v218, 0.5
    %v221 = vmul.f32 %v219, 0.5
    %v222 = vtanh.pop %v210
    %v223 = vmul.f32 %v220, 0.0
    %225 = vrot.lane.b32.xlu0 %v222, 64
    %v226 = vpop.permute.xlu0 %225
    %v228 = vmul.f32 %v220, %v226
    %230 = vrot.lane.b32.xlu0 %v228, 64
    %v231 = vpop.permute.xlu0 %230
    %v233 = vadd.f32 %v223, %v231
    %v234 = vtanh.pop %v233
    %236 = vrot.lane.b32.xlu0 %v234, 64
    %v237 = vpop.permute.xlu0 %236
    %v239 = vmul.f32 %v221, %v237
    %v240 = vsel %vm111, %v239, 0.0
    %v241 = vpack.c.bf16 %v240, %v240
    %v242 = vlaneseq
    %v243 = vshrl.u32 %v242, 7
    %v244 = vsub.s32 0, %v243
    %v245 = vrot.slane %v106, %v244
    %v246 = vlaneseq
    %v247 = vshrl.u32 %v246, 7
    %v248 = vsub.s32 0, %v247
    %v249 = vrot.slane %v107, %v248
    %v266 = vunpack.c.l.b16 %v82
    %v267 = vunpack.c.h.b16 %v82
    %v268 = vunpack.c.l.b16 %v83
    %v269 = vunpack.c.h.b16 %v83
    %v270 = vunpack.c.l.b16 %v84
    %v271 = vunpack.c.h.b16 %v84
    %v272 = vunpack.c.l.b16 %v85
    %v273 = vunpack.c.h.b16 %v85
    %v274 = vunpack.c.l.b16 %v86
    %v275 = vunpack.c.h.b16 %v86
    %v276 = vunpack.c.l.b16 %v87
    %v277 = vunpack.c.h.b16 %v87
    %v278 = vunpack.c.l.b16 %v88
    %v279 = vunpack.c.h.b16 %v88
    %v280 = vunpack.c.l.b16 %v89
    %v281 = vunpack.c.h.b16 %v89
    %v282 = vunpack.c.l.b16 %v90
    %v283 = vunpack.c.h.b16 %v90
    %v284 = vunpack.c.l.b16 %v91
    %v285 = vunpack.c.h.b16 %v91
    %v286 = vunpack.c.l.b16 %v92
    %v287 = vunpack.c.h.b16 %v92
    %v288 = vunpack.c.l.b16 %v93
    %v289 = vunpack.c.h.b16 %v93
    %v290 = vunpack.c.l.b16 %v94
    %v291 = vunpack.c.h.b16 %v94
    %v292 = vunpack.c.l.b16 %v95
    %v293 = vunpack.c.h.b16 %v95
    %v294 = vunpack.c.l.b16 %v96
    %v295 = vunpack.c.h.b16 %v96
    %v296 = vunpack.c.l.b16 %v97
    %v297 = vunpack.c.h.b16 %v97
    %v298 = vpack.c.b16 %v268, %v266
    %v299 = vpack.c.b16 %v269, %v267
    %v300 = vpack.c.b16 %v272, %v270
    %v301 = vpack.c.b16 %v273, %v271
    %v302 = vpack.c.b16 %v276, %v274
    %v303 = vpack.c.b16 %v277, %v275
    %v304 = vpack.c.b16 %v280, %v278
    %v305 = vpack.c.b16 %v281, %v279
    %v306 = vpack.c.b16 %v284, %v282
    %v307 = vpack.c.b16 %v285, %v283
    %v308 = vpack.c.b16 %v288, %v286
    %v309 = vpack.c.b16 %v289, %v287
    %v310 = vpack.c.b16 %v292, %v290
    %v311 = vpack.c.b16 %v293, %v291
    %v312 = vpack.c.b16 %v296, %v294
    %v313 = vpack.c.b16 %v297, %v295
    %330 = vmatprep.subr.bf16.mxu0 %v299
    %331 = vmatpush1.bf16.msra.mxu0 %v298
    %332 = vmatprep.subr.bf16.mxu0 %v301
    %333 = vmatpush1.bf16.msra.mxu0 %v300
    %334 = vmatprep.subr.bf16.mxu0 %v303
    %335 = vmatpush1.bf16.msra.mxu0 %v302
    %336 = vmatprep.subr.bf16.mxu0 %v305
    %337 = vmatpush1.bf16.msra.mxu0 %v304
    %338 = vmatprep.subr.bf16.mxu0 %v307
    %339 = vmatpush1.bf16.msra.mxu0 %v306
    %340 = vmatprep.subr.bf16.mxu0 %v309
    %341 = vmatpush1.bf16.msra.mxu0 %v308
    %342 = vmatprep.subr.bf16.mxu0 %v311
    %343 = vmatpush1.bf16.msra.mxu0 %v310
    %344 = vmatprep.subr.bf16.mxu0 %v313
    %345 = vmatpush1.bf16.msra.mxu0 %v312
    %346 = vmatprep.subr.bf16.mxu0 0
    %347 = vmatpush1.bf16.msra.mxu0 0
    %348 = vmatprep.subr.bf16.mxu0 0
    %349 = vmatpush1.bf16.msra.mxu0 0
    %350 = vmatprep.subr.bf16.mxu0 0
    %351 = vmatpush1.bf16.msra.mxu0 0
    %352 = vmatprep.subr.bf16.mxu0 0
    %353 = vmatpush1.bf16.msra.mxu0 0
    %354 = vmatprep.subr.bf16.mxu0 0
    %355 = vmatpush1.bf16.msra.mxu0 0
    %356 = vmatprep.subr.bf16.mxu0 0
    %357 = vmatpush1.bf16.msra.mxu0 0
    %358 = vmatprep.subr.bf16.mxu0 0
    %359 = vmatpush1.bf16.msra.mxu0 0
    %360 = vmatprep.subr.bf16.mxu0 0
    %361 = vmatpush1.bf16.msra.mxu0 0
    %362 = vmatprep.mubr.bf16.mxu0 0
    %363 = vmatmul.mubr.bf16.gmra.mrb[0].mxu0 %v241
    %v364 = vpop.f32.mrb[0].mxu0
    %v365 = vadd.f32 %v245, %v364
    %v366 = vpop.f32.mrb[0].mxu0
    %v367 = vadd.f32 %v249, %v366
    %v368 = vpop.f32.mrb[0].mxu0
    %v369 = vpop.f32.mrb[0].mxu0
    %370 = vdwg.mxu0
    %v371 = vmul.f32 %v365, 0.5
    %v372 = vmul.f32 %v367, 0.5
    %v373 = vtanh.pop %v371
    %v374 = vtanh.pop %v372
    %v375 = vadd.f32 %v373, 1.0
    %v376 = vadd.f32 %v374, 1.0
    %v377 = vmul.f32 %v375, 0.5
    %v378 = vmul.f32 %v376, 0.5
    %v379 = vtanh.pop %v367
    %v380 = vmul.f32 %v377, 0.0
    %382 = vrot.lane.b32.xlu0 %v379, 64
    %v383 = vpop.permute.xlu0 %382
    %v385 = vmul.f32 %v377, %v383
    %387 = vrot.lane.b32.xlu0 %v385, 64
    %v388 = vpop.permute.xlu0 %387
    %v390 = vadd.f32 %v380, %v388
    %v391 = vtanh.pop %v390
    %393 = vrot.lane.b32.xlu0 %v391, 64
    %v394 = vpop.permute.xlu0 %393
    %v396 = vmul.f32 %v378, %v394
    %v397 = vpack.c.bf16 %v239, %v239
    %398 = vrot.lane.b32.xlu0 %v72, 63
    %v399 = vpop.permute.xlu0 %398
    %v402 = vsel %vm111, %v397, %v399
    %v403 = vsel %vm115, %v402, 1065369472
    %v404 = vsel %vm163, %v403, 0
    %406 = vmatprep.subr.bf16.mxu0 %v146
    %407 = vmatpush1.bf16.msra.mxu0 %v145
    %408 = vmatprep.subr.bf16.mxu0 %v148
    %409 = vmatpush1.bf16.msra.mxu0 %v147
    %410 = vmatprep.subr.bf16.mxu0 %v150
    %411 = vmatpush1.bf16.msra.mxu0 %v149
    %412 = vmatprep.subr.bf16.mxu0 %v152
    %413 = vmatpush1.bf16.msra.mxu0 %v151
    %414 = vmatprep.subr.bf16.mxu0 %v171
    %415 = vmatpush1.bf16.msra.mxu0 %v168
    %416 = vmatprep.subr.bf16.mxu0 0
    %417 = vmatpush1.bf16.msra.mxu0 0
    %418 = vmatprep.subr.bf16.mxu0 0
    %419 = vmatpush1.bf16.msra.mxu0 0
    %420 = vmatprep.subr.bf16.mxu0 0
    %421 = vmatpush1.bf16.msra.mxu0 0
    %422 = vmatprep.subr.bf16.mxu0 0
    %423 = vmatpush1.bf16.msra.mxu0 0
    %424 = vmatprep.subr.bf16.mxu0 0
    %425 = vmatpush1.bf16.msra.mxu0 0
    %426 = vmatprep.subr.bf16.mxu0 0
    %427 = vmatpush1.bf16.msra.mxu0 0
    %428 = vmatprep.subr.bf16.mxu0 0
    %429 = vmatpush1.bf16.msra.mxu0 0
    %430 = vmatprep.subr.bf16.mxu0 0
    %431 = vmatpush1.bf16.msra.mxu0 0
    %432 = vmatprep.subr.bf16.mxu0 0
    %433 = vmatpush1.bf16.msra.mxu0 0
    %434 = vmatprep.subr.bf16.mxu0 0
    %435 = vmatpush1.bf16.msra.mxu0 0
    %436 = vmatprep.subr.bf16.mxu0 0
    %437 = vmatpush1.bf16.msra.mxu0 0
    %438 = vmatprep.mubr.bf16.mxu0 0
    %439 = vmatmul.mubr.bf16.gmra.mrb[0].mxu0 %v404
    %v440 = vpop.f32.mrb[0].mxu0
    %v441 = vadd.f32 0.0, %v440
    %v442 = vpop.f32.mrb[0].mxu0
    %v443 = vadd.f32 0.0, %v442
    %v444 = vpop.f32.mrb[0].mxu0
    %v445 = vpop.f32.mrb[0].mxu0
    %446 = vdwg.mxu0
    %v447 = vmul.f32 %v441, 0.5
    %v448 = vmul.f32 %v443, 0.5
    %v449 = vtanh.pop %v447
    %v450 = vtanh.pop %v448
    %v451 = vadd.f32 %v449, 1.0
    %v452 = vadd.f32 %v450, 1.0
    %v453 = vmul.f32 %v451, 0.5
    %v454 = vmul.f32 %v452, 0.5
    %v455 = vtanh.pop %v443
    %v456 = vmul.f32 %v453, %v233
    %458 = vrot.lane.b32.xlu0 %v455, 64
    %v459 = vpop.permute.xlu0 %458
    %v461 = vmul.f32 %v453, %v459
    %463 = vrot.lane.b32.xlu0 %v461, 64
    %v464 = vpop.permute.xlu0 %463
    %v466 = vadd.f32 %v456, %v464
    %v467 = vtanh.pop %v466
    %469 = vrot.lane.b32.xlu0 %v467, 64
    %v470 = vpop.permute.xlu0 %469
    %v472 = vmul.f32 %v454, %v470
    %474 = vrot.lane.b32.xlu0 %v396, 64
    %v475 = vpop.permute.xlu0 %474
    %v477 = vsel %vm111, %v472, %v475
    %v478 = vpack.c.bf16 %v477, %v477
    %479 = vmatprep.subr.bf16.mxu0 %v299
    %480 = vmatpush1.bf16.msra.mxu0 %v298
    %481 = vmatprep.subr.bf16.mxu0 %v301
    %482 = vmatpush1.bf16.msra.mxu0 %v300
    %483 = vmatprep.subr.bf16.mxu0 %v303
    %484 = vmatpush1.bf16.msra.mxu0 %v302
    %485 = vmatprep.subr.bf16.mxu0 %v305
    %486 = vmatpush1.bf16.msra.mxu0 %v304
    %487 = vmatprep.subr.bf16.mxu0 %v307
    %488 = vmatpush1.bf16.msra.mxu0 %v306
    %489 = vmatprep.subr.bf16.mxu0 %v309
    %490 = vmatpush1.bf16.msra.mxu0 %v308
    %491 = vmatprep.subr.bf16.mxu0 %v311
    %492 = vmatpush1.bf16.msra.mxu0 %v310
    %493 = vmatprep.subr.bf16.mxu0 %v313
    %494 = vmatpush1.bf16.msra.mxu0 %v312
    %495 = vmatprep.subr.bf16.mxu0 0
    %496 = vmatpush1.bf16.msra.mxu0 0
    %497 = vmatprep.subr.bf16.mxu0 0
    %498 = vmatpush1.bf16.msra.mxu0 0
    %499 = vmatprep.subr.bf16.mxu0 0
    %500 = vmatpush1.bf16.msra.mxu0 0
    %501 = vmatprep.subr.bf16.mxu0 0
    %502 = vmatpush1.bf16.msra.mxu0 0
    %503 = vmatprep.subr.bf16.mxu0 0
    %504 = vmatpush1.bf16.msra.mxu0 0
    %505 = vmatprep.subr.bf16.mxu0 0
    %506 = vmatpush1.bf16.msra.mxu0 0
    %507 = vmatprep.subr.bf16.mxu0 0
    %508 = vmatpush1.bf16.msra.mxu0 0
    %509 = vmatprep.subr.bf16.mxu0 0
    %510 = vmatpush1.bf16.msra.mxu0 0
    %511 = vmatprep.mubr.bf16.mxu0 0
    %512 = vmatmul.mubr.bf16.gmra.mrb[0].mxu0 %v478
    %v513 = vpop.f32.mrb[0].mxu0
    %v514 = vadd.f32 %v245, %v513
    %v515 = vpop.f32.mrb[0].mxu0
    %v516 = vadd.f32 %v249, %v515
    %v517 = vpop.f32.mrb[0].mxu0
    %v518 = vpop.f32.mrb[0].mxu0
    %519 = vdwg.mxu0
    %v520 = vmul.f32 %v514, 0.5
    %v521 = vmul.f32 %v516, 0.5
    %v522 = vtanh.pop %v520
    %v523 = vtanh.pop %v521
    %v524 = vadd.f32 %v522, 1.0
    %v525 = vadd.f32 %v523, 1.0
    %v526 = vmul.f32 %v524, 0.5
    %v527 = vmul.f32 %v525, 0.5
    %v528 = vtanh.pop %v516
    %v529 = vmul.f32 %v526, %v390
    %531 = vrot.lane.b32.xlu0 %v528, 64
    %v532 = vpop.permute.xlu0 %531
    %v534 = vmul.f32 %v526, %v532
    %536 = vrot.lane.b32.xlu0 %v534, 64
    %v537 = vpop.permute.xlu0 %536
    %v539 = vadd.f32 %v529, %v537
    %v540 = vtanh.pop %v539
    %542 = vrot.lane.b32.xlu0 %v540, 64
    %v543 = vpop.permute.xlu0 %542
    %v545 = vmul.f32 %v527, %v543
    %v546 = vpack.c.bf16 %v472, %v472
    %547 = vrot.lane.b32.xlu0 %v72, 62
    %v548 = vpop.permute.xlu0 %547
    %v551 = vsel %vm111, %v546, %v548
    %v552 = vsel %vm115, %v551, 1065369472
    %v553 = vsel %vm163, %v552, 0
    %555 = vmatprep.subr.bf16.mxu0 %v146
    %556 = vmatpush1.bf16.msra.mxu0 %v145
    %557 = vmatprep.subr.bf16.mxu0 %v148
    %558 = vmatpush1.bf16.msra.mxu0 %v147
    %559 = vmatprep.subr.bf16.mxu0 %v150
    %560 = vmatpush1.bf16.msra.mxu0 %v149
    %561 = vmatprep.subr.bf16.mxu0 %v152
    %562 = vmatpush1.bf16.msra.mxu0 %v151
    %563 = vmatprep.subr.bf16.mxu0 %v171
    %564 = vmatpush1.bf16.msra.mxu0 %v168
    %565 = vmatprep.subr.bf16.mxu0 0
    %566 = vmatpush1.bf16.msra.mxu0 0
    %567 = vmatprep.subr.bf16.mxu0 0
    %568 = vmatpush1.bf16.msra.mxu0 0
    %569 = vmatprep.subr.bf16.mxu0 0
    %570 = vmatpush1.bf16.msra.mxu0 0
    %571 = vmatprep.subr.bf16.mxu0 0
    %572 = vmatpush1.bf16.msra.mxu0 0
    %573 = vmatprep.subr.bf16.mxu0 0
    %574 = vmatpush1.bf16.msra.mxu0 0
    %575 = vmatprep.subr.bf16.mxu0 0
    %576 = vmatpush1.bf16.msra.mxu0 0
    %577 = vmatprep.subr.bf16.mxu0 0
    %578 = vmatpush1.bf16.msra.mxu0 0
    %579 = vmatprep.subr.bf16.mxu0 0
    %580 = vmatpush1.bf16.msra.mxu0 0
    %581 = vmatprep.subr.bf16.mxu0 0
    %582 = vmatpush1.bf16.msra.mxu0 0
    %583 = vmatprep.subr.bf16.mxu0 0
    %584 = vmatpush1.bf16.msra.mxu0 0
    %585 = vmatprep.subr.bf16.mxu0 0
    %586 = vmatpush1.bf16.msra.mxu0 0
    %587 = vmatprep.mubr.bf16.mxu0 0
    %588 = vmatmul.mubr.bf16.gmra.mrb[0].mxu0 %v553
    %v589 = vpop.f32.mrb[0].mxu0
    %v590 = vadd.f32 0.0, %v589
    %v591 = vpop.f32.mrb[0].mxu0
    %v592 = vadd.f32 0.0, %v591
    %v593 = vpop.f32.mrb[0].mxu0
    %v594 = vpop.f32.mrb[0].mxu0
    %595 = vdwg.mxu0
    %v596 = vmul.f32 %v590, 0.5
    %v597 = vmul.f32 %v592, 0.5
    %v598 = vtanh.pop %v596
    %v599 = vtanh.pop %v597
    %v600 = vadd.f32 %v598, 1.0
    %v601 = vadd.f32 %v599, 1.0
    %v602 = vmul.f32 %v600, 0.5
    %v603 = vmul.f32 %v601, 0.5
    %v604 = vtanh.pop %v592
    %v605 = vmul.f32 %v602, %v466
    %607 = vrot.lane.b32.xlu0 %v604, 64
    %v608 = vpop.permute.xlu0 %607
    %v610 = vmul.f32 %v602, %v608
    %612 = vrot.lane.b32.xlu0 %v610, 64
    %v613 = vpop.permute.xlu0 %612
    %v615 = vadd.f32 %v605, %v613
    %v616 = vtanh.pop %v615
    %618 = vrot.lane.b32.xlu0 %v616, 64
    %v619 = vpop.permute.xlu0 %618
    %v621 = vmul.f32 %v603, %v619
    %623 = vrot.lane.b32.xlu0 %v545, 64
    %v624 = vpop.permute.xlu0 %623
    %v626 = vsel %vm111, %v621, %v624
    %v627 = vpack.c.bf16 %v626, %v626
    %628 = vmatprep.subr.bf16.mxu0 %v299
    %629 = vmatpush1.bf16.msra.mxu0 %v298
    %630 = vmatprep.subr.bf16.mxu0 %v301
    %631 = vmatpush1.bf16.msra.mxu0 %v300
    %632 = vmatprep.subr.bf16.mxu0 %v303
    %633 = vmatpush1.bf16.msra.mxu0 %v302
    %634 = vmatprep.subr.bf16.mxu0 %v305
    %635 = vmatpush1.bf16.msra.mxu0 %v304
    %636 = vmatprep.subr.bf16.mxu0 %v307
    %637 = vmatpush1.bf16.msra.mxu0 %v306
    %638 = vmatprep.subr.bf16.mxu0 %v309
    %639 = vmatpush1.bf16.msra.mxu0 %v308
    %640 = vmatprep.subr.bf16.mxu0 %v311
    %641 = vmatpush1.bf16.msra.mxu0 %v310
    %642 = vmatprep.subr.bf16.mxu0 %v313
    %643 = vmatpush1.bf16.msra.mxu0 %v312
    %644 = vmatprep.subr.bf16.mxu0 0
    %645 = vmatpush1.bf16.msra.mxu0 0
    %646 = vmatprep.subr.bf16.mxu0 0
    %647 = vmatpush1.bf16.msra.mxu0 0
    %648 = vmatprep.subr.bf16.mxu0 0
    %649 = vmatpush1.bf16.msra.mxu0 0
    %650 = vmatprep.subr.bf16.mxu0 0
    %651 = vmatpush1.bf16.msra.mxu0 0
    %652 = vmatprep.subr.bf16.mxu0 0
    %653 = vmatpush1.bf16.msra.mxu0 0
    %654 = vmatprep.subr.bf16.mxu0 0
    %655 = vmatpush1.bf16.msra.mxu0 0
    %656 = vmatprep.subr.bf16.mxu0 0
    %657 = vmatpush1.bf16.msra.mxu0 0
    %658 = vmatprep.subr.bf16.mxu0 0
    %659 = vmatpush1.bf16.msra.mxu0 0
    %660 = vmatprep.mubr.bf16.mxu0 0
    %661 = vmatmul.mubr.bf16.gmra.mrb[0].mxu0 %v627
    %v662 = vpop.f32.mrb[0].mxu0
    %v663 = vadd.f32 %v245, %v662
    %v664 = vpop.f32.mrb[0].mxu0
    %v665 = vadd.f32 %v249, %v664
    %v666 = vpop.f32.mrb[0].mxu0
    %v667 = vpop.f32.mrb[0].mxu0
    %668 = vdwg.mxu0
    %v669 = vmul.f32 %v663, 0.5
    %v670 = vmul.f32 %v665, 0.5
    %v671 = vtanh.pop %v669
    %v672 = vtanh.pop %v670
    %v673 = vadd.f32 %v671, 1.0
    %v674 = vadd.f32 %v672, 1.0
    %v675 = vmul.f32 %v673, 0.5
    %v676 = vmul.f32 %v674, 0.5
    %v677 = vtanh.pop %v665
    %v678 = vmul.f32 %v675, %v539
    %680 = vrot.lane.b32.xlu0 %v677, 64
    %v681 = vpop.permute.xlu0 %680
    %v683 = vmul.f32 %v675, %v681
    %685 = vrot.lane.b32.xlu0 %v683, 64
    %v686 = vpop.permute.xlu0 %685
    %v688 = vadd.f32 %v678, %v686
    %v689 = vtanh.pop %v688
    %691 = vrot.lane.b32.xlu0 %v689, 64
    %v692 = vpop.permute.xlu0 %691
    %v694 = vmul.f32 %v676, %v692
    %v695 = vpack.c.bf16 %v621, %v621
    %696 = vrot.lane.b32.xlu0 %v72, 61
    %v697 = vpop.permute.xlu0 %696
    %v700 = vsel %vm111, %v695, %v697
    %v701 = vsel %vm115, %v700, 1065369472
    %v702 = vsel %vm163, %v701, 0
    %704 = vmatprep.subr.bf16.mxu0 %v146
    %705 = vmatpush1.bf16.msra.mxu0 %v145
    %706 = vmatprep.subr.bf16.mxu0 %v148
    %707 = vmatpush1.bf16.msra.mxu0 %v147
    %708 = vmatprep.subr.bf16.mxu0 %v150
    %709 = vmatpush1.bf16.msra.mxu0 %v149
    %710 = vmatprep.subr.bf16.mxu0 %v152
    %711 = vmatpush1.bf16.msra.mxu0 %v151
    %712 = vmatprep.subr.bf16.mxu0 %v171
    %713 = vmatpush1.bf16.msra.mxu0 %v168
    %714 = vmatprep.subr.bf16.mxu0 0
    %715 = vmatpush1.bf16.msra.mxu0 0
    %716 = vmatprep.subr.bf16.mxu0 0
    %717 = vmatpush1.bf16.msra.mxu0 0
    %718 = vmatprep.subr.bf16.mxu0 0
    %719 = vmatpush1.bf16.msra.mxu0 0
    %720 = vmatprep.subr.bf16.mxu0 0
    %721 = vmatpush1.bf16.msra.mxu0 0
    %722 = vmatprep.subr.bf16.mxu0 0
    %723 = vmatpush1.bf16.msra.mxu0 0
    %724 = vmatprep.subr.bf16.mxu0 0
    %725 = vmatpush1.bf16.msra.mxu0 0
    %726 = vmatprep.subr.bf16.mxu0 0
    %727 = vmatpush1.bf16.msra.mxu0 0
    %728 = vmatprep.subr.bf16.mxu0 0
    %729 = vmatpush1.bf16.msra.mxu0 0
    %730 = vmatprep.subr.bf16.mxu0 0
    %731 = vmatpush1.bf16.msra.mxu0 0
    %732 = vmatprep.subr.bf16.mxu0 0
    %733 = vmatpush1.bf16.msra.mxu0 0
    %734 = vmatprep.subr.bf16.mxu0 0
    %735 = vmatpush1.bf16.msra.mxu0 0
    %736 = vmatprep.mubr.bf16.mxu0 0
    %737 = vmatmul.mubr.bf16.gmra.mrb[0].mxu0 %v702
    %v738 = vpop.f32.mrb[0].mxu0
    %v739 = vadd.f32 0.0, %v738
    %v740 = vpop.f32.mrb[0].mxu0
    %v741 = vadd.f32 0.0, %v740
    %v742 = vpop.f32.mrb[0].mxu0
    %v743 = vpop.f32.mrb[0].mxu0
    %744 = vdwg.mxu0
    %v745 = vmul.f32 %v739, 0.5
    %v746 = vmul.f32 %v741, 0.5
    %v747 = vtanh.pop %v745
    %v748 = vtanh.pop %v746
    %v749 = vadd.f32 %v747, 1.0
    %v750 = vadd.f32 %v748, 1.0
    %v751 = vmul.f32 %v749, 0.5
    %v752 = vmul.f32 %v750, 0.5
    %v753 = vtanh.pop %v741
    %v754 = vmul.f32 %v751, %v615
    %756 = vrot.lane.b32.xlu0 %v753, 64
    %v757 = vpop.permute.xlu0 %756
    %v759 = vmul.f32 %v751, %v757
    %761 = vrot.lane.b32.xlu0 %v759, 64
    %v762 = vpop.permute.xlu0 %761
    %v764 = vadd.f32 %v754, %v762
    %v765 = vtanh.pop %v764
    %767 = vrot.lane.b32.xlu0 %v765, 64
    %v768 = vpop.permute.xlu0 %767
    %v770 = vmul.f32 %v752, %v768
    %772 = vrot.lane.b32.xlu0 %v694, 64
    %v773 = vpop.permute.xlu0 %772
    %v775 = vsel %vm111, %v770, %v773
    %v776 = vpack.c.bf16 %v775, %v775
    %777 = vmatprep.subr.bf16.mxu0 %v299
    %778 = vmatpush1.bf16.msra.mxu0 %v298
    %779 = vmatprep.subr.bf16.mxu0 %v301
    %780 = vmatpush1.bf16.msra.mxu0 %v300
    %781 = vmatprep.subr.bf16.mxu0 %v303
    %782 = vmatpush1.bf16.msra.mxu0 %v302
    %783 = vmatprep.subr.bf16.mxu0 %v305
    %784 = vmatpush1.bf16.msra.mxu0 %v304
    %785 = vmatprep.subr.bf16.mxu0 %v307
    %786 = vmatpush1.bf16.msra.mxu0 %v306
    %787 = vmatprep.subr.bf16.mxu0 %v309
    %788 = vmatpush1.bf16.msra.mxu0 %v308
    %789 = vmatprep.subr.bf16.mxu0 %v311
    %790 = vmatpush1.bf16.msra.mxu0 %v310
    %791 = vmatprep.subr.bf16.mxu0 %v313
    %792 = vmatpush1.bf16.msra.mxu0 %v312
    %793 = vmatprep.subr.bf16.mxu0 0
    %794 = vmatpush1.bf16.msra.mxu0 0
    %795 = vmatprep.subr.bf16.mxu0 0
    %796 = vmatpush1.bf16.msra.mxu0 0
    %797 = vmatprep.subr.bf16.mxu0 0
    %798 = vmatpush1.bf16.msra.mxu0 0
    %799 = vmatprep.subr.bf16.mxu0 0
    %800 = vmatpush1.bf16.msra.mxu0 0
    %801 = vmatprep.subr.bf16.mxu0 0
    %802 = vmatpush1.bf16.msra.mxu0 0
    %803 = vmatprep.subr.bf16.mxu0 0
    %804 = vmatpush1.bf16.msra.mxu0 0
    %805 = vmatprep.subr.bf16.mxu0 0
    %806 = vmatpush1.bf16.msra.mxu0 0
    %807 = vmatprep.subr.bf16.mxu0 0
    %808 = vmatpush1.bf16.msra.mxu0 0
    %809 = vmatprep.mubr.bf16.mxu0 0
    %810 = vmatmul.mubr.bf16.gmra.mrb[0].mxu0 %v776
    %v811 = vpop.f32.mrb[0].mxu0
    %v812 = vadd.f32 %v245, %v811
    %v813 = vpop.f32.mrb[0].mxu0
    %v814 = vadd.f32 %v249, %v813
    %v815 = vpop.f32.mrb[0].mxu0
    %v816 = vpop.f32.mrb[0].mxu0
    %817 = vdwg.mxu0
    %v818 = vmul.f32 %v812, 0.5
    %v819 = vmul.f32 %v814, 0.5
    %v820 = vtanh.pop %v818
    %v821 = vtanh.pop %v819
    %v822 = vadd.f32 %v820, 1.0
    %v823 = vadd.f32 %v821, 1.0
    %v824 = vmul.f32 %v822, 0.5
    %v825 = vmul.f32 %v823, 0.5
    %v826 = vtanh.pop %v814
    %v827 = vmul.f32 %v824, %v688
    %829 = vrot.lane.b32.xlu0 %v826, 64
    %v830 = vpop.permute.xlu0 %829
    %v832 = vmul.f32 %v824, %v830
    %834 = vrot.lane.b32.xlu0 %v832, 64
    %v835 = vpop.permute.xlu0 %834
    %v837 = vadd.f32 %v827, %v835
    %v838 = vtanh.pop %v837
    %840 = vrot.lane.b32.xlu0 %v838, 64
    %v841 = vpop.permute.xlu0 %840
    %v843 = vmul.f32 %v825, %v841
    %v844 = vpack.c.bf16 %v770, %v770
    %845 = vrot.lane.b32.xlu0 %v72, 60
    %v846 = vpop.permute.xlu0 %845
    %v849 = vsel %vm111, %v844, %v846
    %v850 = vsel %vm115, %v849, 1065369472
    %v851 = vsel %vm163, %v850, 0
    %853 = vmatprep.subr.bf16.mxu0 %v146
    %854 = vmatpush1.bf16.msra.mxu0 %v145
    %855 = vmatprep.subr.bf16.mxu0 %v148
    %856 = vmatpush1.bf16.msra.mxu0 %v147
    %857 = vmatprep.subr.bf16.mxu0 %v150
    %858 = vmatpush1.bf16.msra.mxu0 %v149
    %859 = vmatprep.subr.bf16.mxu0 %v152
    %860 = vmatpush1.bf16.msra.mxu0 %v151
    %861 = vmatprep.subr.bf16.mxu0 %v171
    %862 = vmatpush1.bf16.msra.mxu0 %v168
    %863 = vmatprep.subr.bf16.mxu0 0
    %864 = vmatpush1.bf16.msra.mxu0 0
    %865 = vmatprep.subr.bf16.mxu0 0
    %866 = vmatpush1.bf16.msra.mxu0 0
    %867 = vmatprep.subr.bf16.mxu0 0
    %868 = vmatpush1.bf16.msra.mxu0 0
    %869 = vmatprep.subr.bf16.mxu0 0
    %870 = vmatpush1.bf16.msra.mxu0 0
    %871 = vmatprep.subr.bf16.mxu0 0
    %872 = vmatpush1.bf16.msra.mxu0 0
    %873 = vmatprep.subr.bf16.mxu0 0
    %874 = vmatpush1.bf16.msra.mxu0 0
    %875 = vmatprep.subr.bf16.mxu0 0
    %876 = vmatpush1.bf16.msra.mxu0 0
    %877 = vmatprep.subr.bf16.mxu0 0
    %878 = vmatpush1.bf16.msra.mxu0 0
    %879 = vmatprep.subr.bf16.mxu0 0
    %880 = vmatpush1.bf16.msra.mxu0 0
    %881 = vmatprep.subr.bf16.mxu0 0
    %882 = vmatpush1.bf16.msra.mxu0 0
    %883 = vmatprep.subr.bf16.mxu0 0
    %884 = vmatpush1.bf16.msra.mxu0 0
    %885 = vmatprep.mubr.bf16.mxu0 0
    %886 = vmatmul.mubr.bf16.gmra.mrb[0].mxu0 %v851
    %v887 = vpop.f32.mrb[0].mxu0
    %v888 = vadd.f32 0.0, %v887
    %v889 = vpop.f32.mrb[0].mxu0
    %v890 = vadd.f32 0.0, %v889
    %v891 = vpop.f32.mrb[0].mxu0
    %v892 = vpop.f32.mrb[0].mxu0
    %893 = vdwg.mxu0
    %v894 = vmul.f32 %v888, 0.5
    %v895 = vmul.f32 %v890, 0.5
    %v896 = vtanh.pop %v894
    %v897 = vtanh.pop %v895
    %v898 = vadd.f32 %v896, 1.0
    %v899 = vadd.f32 %v897, 1.0
    %v900 = vmul.f32 %v898, 0.5
    %v901 = vmul.f32 %v899, 0.5
    %v902 = vtanh.pop %v890
    %v903 = vmul.f32 %v900, %v764
    %905 = vrot.lane.b32.xlu0 %v902, 64
    %v906 = vpop.permute.xlu0 %905
    %v908 = vmul.f32 %v900, %v906
    %910 = vrot.lane.b32.xlu0 %v908, 64
    %v911 = vpop.permute.xlu0 %910
    %v913 = vadd.f32 %v903, %v911
    %v914 = vtanh.pop %v913
    %916 = vrot.lane.b32.xlu0 %v914, 64
    %v917 = vpop.permute.xlu0 %916
    %v919 = vmul.f32 %v901, %v917
    %921 = vrot.lane.b32.xlu0 %v843, 64
    %v922 = vpop.permute.xlu0 %921
    %v924 = vsel %vm111, %v919, %v922
    %v925 = vpack.c.bf16 %v924, %v924
    %926 = vmatprep.subr.bf16.mxu0 %v299
    %927 = vmatpush1.bf16.msra.mxu0 %v298
    %928 = vmatprep.subr.bf16.mxu0 %v301
    %929 = vmatpush1.bf16.msra.mxu0 %v300
    %930 = vmatprep.subr.bf16.mxu0 %v303
    %931 = vmatpush1.bf16.msra.mxu0 %v302
    %932 = vmatprep.subr.bf16.mxu0 %v305
    %933 = vmatpush1.bf16.msra.mxu0 %v304
    %934 = vmatprep.subr.bf16.mxu0 %v307
    %935 = vmatpush1.bf16.msra.mxu0 %v306
    %936 = vmatprep.subr.bf16.mxu0 %v309
    %937 = vmatpush1.bf16.msra.mxu0 %v308
    %938 = vmatprep.subr.bf16.mxu0 %v311
    %939 = vmatpush1.bf16.msra.mxu0 %v310
    %940 = vmatprep.subr.bf16.mxu0 %v313
    %941 = vmatpush1.bf16.msra.mxu0 %v312
    %942 = vmatprep.subr.bf16.mxu0 0
    %943 = vmatpush1.bf16.msra.mxu0 0
    %944 = vmatprep.subr.bf16.mxu0 0
    %945 = vmatpush1.bf16.msra.mxu0 0
    %946 = vmatprep.subr.bf16.mxu0 0
    %947 = vmatpush1.bf16.msra.mxu0 0
    %948 = vmatprep.subr.bf16.mxu0 0
    %949 = vmatpush1.bf16.msra.mxu0 0
    %950 = vmatprep.subr.bf16.mxu0 0
    %951 = vmatpush1.bf16.msra.mxu0 0
    %952 = vmatprep.subr.bf16.mxu0 0
    %953 = vmatpush1.bf16.msra.mxu0 0
    %954 = vmatprep.subr.bf16.mxu0 0
    %955 = vmatpush1.bf16.msra.mxu0 0
    %956 = vmatprep.subr.bf16.mxu0 0
    %957 = vmatpush1.bf16.msra.mxu0 0
    %958 = vmatprep.mubr.bf16.mxu0 0
    %959 = vmatmul.mubr.bf16.gmra.mrb[0].mxu0 %v925
    %v960 = vpop.f32.mrb[0].mxu0
    %v961 = vadd.f32 %v245, %v960
    %v962 = vpop.f32.mrb[0].mxu0
    %v963 = vadd.f32 %v249, %v962
    %v964 = vpop.f32.mrb[0].mxu0
    %v965 = vpop.f32.mrb[0].mxu0
    %966 = vdwg.mxu0
    %v967 = vmul.f32 %v961, 0.5
    %v968 = vmul.f32 %v963, 0.5
    %v969 = vtanh.pop %v967
    %v970 = vtanh.pop %v968
    %v971 = vadd.f32 %v969, 1.0
    %v972 = vadd.f32 %v970, 1.0
    %v973 = vmul.f32 %v971, 0.5
    %v974 = vmul.f32 %v972, 0.5
    %v975 = vtanh.pop %v963
    %v976 = vmul.f32 %v973, %v837
    %978 = vrot.lane.b32.xlu0 %v975, 64
    %v979 = vpop.permute.xlu0 %978
    %v981 = vmul.f32 %v973, %v979
    %983 = vrot.lane.b32.xlu0 %v981, 64
    %v984 = vpop.permute.xlu0 %983
    %v986 = vadd.f32 %v976, %v984
    %v987 = vtanh.pop %v986
    %989 = vrot.lane.b32.xlu0 %v987, 64
    %v990 = vpop.permute.xlu0 %989
    %v992 = vmul.f32 %v974, %v990
    %v993 = vpack.c.bf16 %v919, %v919
    %994 = vrot.lane.b32.xlu0 %v72, 59
    %v995 = vpop.permute.xlu0 %994
    %v998 = vsel %vm111, %v993, %v995
    %v999 = vsel %vm115, %v998, 1065369472
    %v1000 = vsel %vm163, %v999, 0
    %1002 = vmatprep.subr.bf16.mxu0 %v146
    %1003 = vmatpush1.bf16.msra.mxu0 %v145
    %1004 = vmatprep.subr.bf16.mxu0 %v148
    %1005 = vmatpush1.bf16.msra.mxu0 %v147
    %1006 = vmatprep.subr.bf16.mxu0 %v150
    %1007 = vmatpush1.bf16.msra.mxu0 %v149
    %1008 = vmatprep.subr.bf16.mxu0 %v152
    %1009 = vmatpush1.bf16.msra.mxu0 %v151
    %1010 = vmatprep.subr.bf16.mxu0 %v171
    %1011 = vmatpush1.bf16.msra.mxu0 %v168
    %1012 = vmatprep.subr.bf16.mxu0 0
    %1013 = vmatpush1.bf16.msra.mxu0 0
    %1014 = vmatprep.subr.bf16.mxu0 0
    %1015 = vmatpush1.bf16.msra.mxu0 0
    %1016 = vmatprep.subr.bf16.mxu0 0
    %1017 = vmatpush1.bf16.msra.mxu0 0
    %1018 = vmatprep.subr.bf16.mxu0 0
    %1019 = vmatpush1.bf16.msra.mxu0 0
    %1020 = vmatprep.subr.bf16.mxu0 0
    %1021 = vmatpush1.bf16.msra.mxu0 0
    %1022 = vmatprep.subr.bf16.mxu0 0
    %1023 = vmatpush1.bf16.msra.mxu0 0
    %1024 = vmatprep.subr.bf16.mxu0 0
    %1025 = vmatpush1.bf16.msra.mxu0 0
    %1026 = vmatprep.subr.bf16.mxu0 0
    %1027 = vmatpush1.bf16.msra.mxu0 0
    %1028 = vmatprep.subr.bf16.mxu0 0
    %1029 = vmatpush1.bf16.msra.mxu0 0
    %1030 = vmatprep.subr.bf16.mxu0 0
    %1031 = vmatpush1.bf16.msra.mxu0 0
    %1032 = vmatprep.subr.bf16.mxu0 0
    %1033 = vmatpush1.bf16.msra.mxu0 0
    %1034 = vmatprep.mubr.bf16.mxu0 0
    %1035 = vmatmul.mubr.bf16.gmra.mrb[0].mxu0 %v1000
    %v1036 = vpop.f32.mrb[0].mxu0
    %v1037 = vadd.f32 0.0, %v1036
    %v1038 = vpop.f32.mrb[0].mxu0
    %v1039 = vadd.f32 0.0, %v1038
    %v1040 = vpop.f32.mrb[0].mxu0
    %v1041 = vpop.f32.mrb[0].mxu0
    %1042 = vdwg.mxu0
    %v1043 = vmul.f32 %v1037, 0.5
    %v1044 = vmul.f32 %v1039, 0.5
    %v1045 = vtanh.pop %v1043
    %v1046 = vtanh.pop %v1044
    %v1047 = vadd.f32 %v1045, 1.0
    %v1048 = vadd.f32 %v1046, 1.0
    %v1049 = vmul.f32 %v1047, 0.5
    %v1050 = vmul.f32 %v1048, 0.5
    %v1051 = vtanh.pop %v1039
    %v1052 = vmul.f32 %v1049, %v913
    %1054 = vrot.lane.b32.xlu0 %v1051, 64
    %v1055 = vpop.permute.xlu0 %1054
    %v1057 = vmul.f32 %v1049, %v1055
    %1059 = vrot.lane.b32.xlu0 %v1057, 64
    %v1060 = vpop.permute.xlu0 %1059
    %v1062 = vadd.f32 %v1052, %v1060
    %v1063 = vtanh.pop %v1062
    %1065 = vrot.lane.b32.xlu0 %v1063, 64
    %v1066 = vpop.permute.xlu0 %1065
    %v1068 = vmul.f32 %v1050, %v1066
    %1070 = vrot.lane.b32.xlu0 %v992, 64
    %v1071 = vpop.permute.xlu0 %1070
    %v1073 = vsel %vm111, %v1068, %v1071
    %v1074 = vpack.c.bf16 %v1073, %v1073
    %1075 = vmatprep.subr.bf16.mxu0 %v299
    %1076 = vmatpush1.bf16.msra.mxu0 %v298
    %1077 = vmatprep.subr.bf16.mxu0 %v301
    %1078 = vmatpush1.bf16.msra.mxu0 %v300
    %1079 = vmatprep.subr.bf16.mxu0 %v303
    %1080 = vmatpush1.bf16.msra.mxu0 %v302
    %1081 = vmatprep.subr.bf16.mxu0 %v305
    %1082 = vmatpush1.bf16.msra.mxu0 %v304
    %1083 = vmatprep.subr.bf16.mxu0 %v307
    %1084 = vmatpush1.bf16.msra.mxu0 %v306
    %1085 = vmatprep.subr.bf16.mxu0 %v309
    %1086 = vmatpush1.bf16.msra.mxu0 %v308
    %1087 = vmatprep.subr.bf16.mxu0 %v311
    %1088 = vmatpush1.bf16.msra.mxu0 %v310
    %1089 = vmatprep.subr.bf16.mxu0 %v313
    %1090 = vmatpush1.bf16.msra.mxu0 %v312
    %1091 = vmatprep.subr.bf16.mxu0 0
    %1092 = vmatpush1.bf16.msra.mxu0 0
    %1093 = vmatprep.subr.bf16.mxu0 0
    %1094 = vmatpush1.bf16.msra.mxu0 0
    %1095 = vmatprep.subr.bf16.mxu0 0
    %1096 = vmatpush1.bf16.msra.mxu0 0
    %1097 = vmatprep.subr.bf16.mxu0 0
    %1098 = vmatpush1.bf16.msra.mxu0 0
    %1099 = vmatprep.subr.bf16.mxu0 0
    %1100 = vmatpush1.bf16.msra.mxu0 0
    %1101 = vmatprep.subr.bf16.mxu0 0
    %1102 = vmatpush1.bf16.msra.mxu0 0
    %1103 = vmatprep.subr.bf16.mxu0 0
    %1104 = vmatpush1.bf16.msra.mxu0 0
    %1105 = vmatprep.subr.bf16.mxu0 0
    %1106 = vmatpush1.bf16.msra.mxu0 0
    %1107 = vmatprep.mubr.bf16.mxu0 0
    %1108 = vmatmul.mubr.bf16.gmra.mrb[0].mxu0 %v1074
    %v1109 = vpop.f32.mrb[0].mxu0
    %v1110 = vadd.f32 %v245, %v1109
    %v1111 = vpop.f32.mrb[0].mxu0
    %v1112 = vadd.f32 %v249, %v1111
    %v1113 = vpop.f32.mrb[0].mxu0
    %v1114 = vpop.f32.mrb[0].mxu0
    %1115 = vdwg.mxu0
    %v1116 = vmul.f32 %v1110, 0.5
    %v1117 = vmul.f32 %v1112, 0.5
    %v1118 = vtanh.pop %v1116
    %v1119 = vtanh.pop %v1117
    %v1120 = vadd.f32 %v1118, 1.0
    %v1121 = vadd.f32 %v1119, 1.0
    %v1122 = vmul.f32 %v1120, 0.5
    %v1123 = vmul.f32 %v1121, 0.5
    %v1124 = vtanh.pop %v1112
    %v1125 = vmul.f32 %v1122, %v986
    %1127 = vrot.lane.b32.xlu0 %v1124, 64
    %v1128 = vpop.permute.xlu0 %1127
    %v1130 = vmul.f32 %v1122, %v1128
    %1132 = vrot.lane.b32.xlu0 %v1130, 64
    %v1133 = vpop.permute.xlu0 %1132
    %v1135 = vadd.f32 %v1125, %v1133
    %v1136 = vtanh.pop %v1135
    %1138 = vrot.lane.b32.xlu0 %v1136, 64
    %v1139 = vpop.permute.xlu0 %1138
    %v1141 = vmul.f32 %v1123, %v1139
    %v1142 = vpack.c.bf16 %v1068, %v1068
    %1143 = vrot.lane.b32.xlu0 %v72, 58
    %v1144 = vpop.permute.xlu0 %1143
    %v1147 = vsel %vm111, %v1142, %v1144
    %v1148 = vsel %vm115, %v1147, 1065369472
    %v1149 = vsel %vm163, %v1148, 0
    %1151 = vmatprep.subr.bf16.mxu0 %v146
    %1152 = vmatpush1.bf16.msra.mxu0 %v145
    %1153 = vmatprep.subr.bf16.mxu0 %v148
    %1154 = vmatpush1.bf16.msra.mxu0 %v147
    %1155 = vmatprep.subr.bf16.mxu0 %v150
    %1156 = vmatpush1.bf16.msra.mxu0 %v149
    %1157 = vmatprep.subr.bf16.mxu0 %v152
    %1158 = vmatpush1.bf16.msra.mxu0 %v151
    %1159 = vmatprep.subr.bf16.mxu0 %v171
    %1160 = vmatpush1.bf16.msra.mxu0 %v168
    %1161 = vmatprep.subr.bf16.mxu0 0
    %1162 = vmatpush1.bf16.msra.mxu0 0
    %1163 = vmatprep.subr.bf16.mxu0 0
    %1164 = vmatpush1.bf16.msra.mxu0 0
    %1165 = vmatprep.subr.bf16.mxu0 0
    %1166 = vmatpush1.bf16.msra.mxu0 0
    %1167 = vmatprep.subr.bf16.mxu0 0
    %1168 = vmatpush1.bf16.msra.mxu0 0
    %1169 = vmatprep.subr.bf16.mxu0 0
    %1170 = vmatpush1.bf16.msra.mxu0 0
    %1171 = vmatprep.subr.bf16.mxu0 0
    %1172 = vmatpush1.bf16.msra.mxu0 0
    %1173 = vmatprep.subr.bf16.mxu0 0
    %1174 = vmatpush1.bf16.msra.mxu0 0
    %1175 = vmatprep.subr.bf16.mxu0 0
    %1176 = vmatpush1.bf16.msra.mxu0 0
    %1177 = vmatprep.subr.bf16.mxu0 0
    %1178 = vmatpush1.bf16.msra.mxu0 0
    %1179 = vmatprep.subr.bf16.mxu0 0
    %1180 = vmatpush1.bf16.msra.mxu0 0
    %1181 = vmatprep.subr.bf16.mxu0 0
    %1182 = vmatpush1.bf16.msra.mxu0 0
    %1183 = vmatprep.mubr.bf16.mxu0 0
    %1184 = vmatmul.mubr.bf16.gmra.mrb[0].mxu0 %v1149
    %v1185 = vpop.f32.mrb[0].mxu0
    %v1186 = vadd.f32 0.0, %v1185
    %v1187 = vpop.f32.mrb[0].mxu0
    %v1188 = vadd.f32 0.0, %v1187
    %v1189 = vpop.f32.mrb[0].mxu0
    %v1190 = vpop.f32.mrb[0].mxu0
    %1191 = vdwg.mxu0
    %v1192 = vmul.f32 %v1186, 0.5
    %v1193 = vmul.f32 %v1188, 0.5
    %v1194 = vtanh.pop %v1192
    %v1195 = vtanh.pop %v1193
    %v1196 = vadd.f32 %v1194, 1.0
    %v1197 = vadd.f32 %v1195, 1.0
    %v1198 = vmul.f32 %v1196, 0.5
    %v1199 = vmul.f32 %v1197, 0.5
    %v1200 = vtanh.pop %v1188
    %v1201 = vmul.f32 %v1198, %v1062
    %1203 = vrot.lane.b32.xlu0 %v1200, 64
    %v1204 = vpop.permute.xlu0 %1203
    %v1206 = vmul.f32 %v1198, %v1204
    %1208 = vrot.lane.b32.xlu0 %v1206, 64
    %v1209 = vpop.permute.xlu0 %1208
    %v1211 = vadd.f32 %v1201, %v1209
    %v1212 = vtanh.pop %v1211
    %1214 = vrot.lane.b32.xlu0 %v1212, 64
    %v1215 = vpop.permute.xlu0 %1214
    %v1217 = vmul.f32 %v1199, %v1215
    %1219 = vrot.lane.b32.xlu0 %v1141, 64
    %v1220 = vpop.permute.xlu0 %1219
    %v1222 = vsel %vm111, %v1217, %v1220
    %v1223 = vpack.c.bf16 %v1222, %v1222
    %1224 = vmatprep.subr.bf16.mxu0 %v299
    %1225 = vmatpush1.bf16.msra.mxu0 %v298
    %1226 = vmatprep.subr.bf16.mxu0 %v301
    %1227 = vmatpush1.bf16.msra.mxu0 %v300
    %1228 = vmatprep.subr.bf16.mxu0 %v303
    %1229 = vmatpush1.bf16.msra.mxu0 %v302
    %1230 = vmatprep.subr.bf16.mxu0 %v305
    %1231 = vmatpush1.bf16.msra.mxu0 %v304
    %1232 = vmatprep.subr.bf16.mxu0 %v307
    %1233 = vmatpush1.bf16.msra.mxu0 %v306
    %1234 = vmatprep.subr.bf16.mxu0 %v309
    %1235 = vmatpush1.bf16.msra.mxu0 %v308
    %1236 = vmatprep.subr.bf16.mxu0 %v311
    %1237 = vmatpush1.bf16.msra.mxu0 %v310
    %1238 = vmatprep.subr.bf16.mxu0 %v313
    %1239 = vmatpush1.bf16.msra.mxu0 %v312
    %1240 = vmatprep.subr.bf16.mxu0 0
    %1241 = vmatpush1.bf16.msra.mxu0 0
    %1242 = vmatprep.subr.bf16.mxu0 0
    %1243 = vmatpush1.bf16.msra.mxu0 0
    %1244 = vmatprep.subr.bf16.mxu0 0
    %1245 = vmatpush1.bf16.msra.mxu0 0
    %1246 = vmatprep.subr.bf16.mxu0 0
    %1247 = vmatpush1.bf16.msra.mxu0 0
    %1248 = vmatprep.subr.bf16.mxu0 0
    %1249 = vmatpush1.bf16.msra.mxu0 0
    %1250 = vmatprep.subr.bf16.mxu0 0
    %1251 = vmatpush1.bf16.msra.mxu0 0
    %1252 = vmatprep.subr.bf16.mxu0 0
    %1253 = vmatpush1.bf16.msra.mxu0 0
    %1254 = vmatprep.subr.bf16.mxu0 0
    %1255 = vmatpush1.bf16.msra.mxu0 0
    %1256 = vmatprep.mubr.bf16.mxu0 0
    %1257 = vmatmul.mubr.bf16.gmra.mrb[0].mxu0 %v1223
    %v1258 = vpop.f32.mrb[0].mxu0
    %v1259 = vadd.f32 %v245, %v1258
    %v1260 = vpop.f32.mrb[0].mxu0
    %v1261 = vadd.f32 %v249, %v1260
    %v1262 = vpop.f32.mrb[0].mxu0
    %v1263 = vpop.f32.mrb[0].mxu0
    %1264 = vdwg.mxu0
    %v1265 = vmul.f32 %v1259, 0.5
    %v1266 = vmul.f32 %v1261, 0.5
    %v1267 = vtanh.pop %v1265
    %v1268 = vtanh.pop %v1266
    %v1269 = vadd.f32 %v1267, 1.0
    %v1270 = vadd.f32 %v1268, 1.0
    %v1271 = vmul.f32 %v1269, 0.5
    %v1272 = vmul.f32 %v1270, 0.5
    %v1273 = vtanh.pop %v1261
    %v1274 = vmul.f32 %v1271, %v1135
    %1276 = vrot.lane.b32.xlu0 %v1273, 64
    %v1277 = vpop.permute.xlu0 %1276
    %v1279 = vmul.f32 %v1271, %v1277
    %1281 = vrot.lane.b32.xlu0 %v1279, 64
    %v1282 = vpop.permute.xlu0 %1281
    %v1284 = vadd.f32 %v1274, %v1282
    %v1285 = vtanh.pop %v1284
    %1287 = vrot.lane.b32.xlu0 %v1285, 64
    %v1288 = vpop.permute.xlu0 %1287
    %v1290 = vmul.f32 %v1272, %v1288
    %v1291 = vpack.c.bf16 %v1217, %v1217
    %1292 = vrot.lane.b32.xlu0 %v72, 57
    %v1293 = vpop.permute.xlu0 %1292
    %v1296 = vsel %vm111, %v1291, %v1293
    %v1297 = vsel %vm115, %v1296, 1065369472
    %v1298 = vsel %vm163, %v1297, 0
    %1300 = vmatprep.subr.bf16.mxu0 %v146
    %1301 = vmatpush1.bf16.msra.mxu0 %v145
    %1302 = vmatprep.subr.bf16.mxu0 %v148
    %1303 = vmatpush1.bf16.msra.mxu0 %v147
    %1304 = vmatprep.subr.bf16.mxu0 %v150
    %1305 = vmatpush1.bf16.msra.mxu0 %v149
    %1306 = vmatprep.subr.bf16.mxu0 %v152
    %1307 = vmatpush1.bf16.msra.mxu0 %v151
    %1308 = vmatprep.subr.bf16.mxu0 %v171
    %1309 = vmatpush1.bf16.msra.mxu0 %v168
    %1310 = vmatprep.subr.bf16.mxu0 0
    %1311 = vmatpush1.bf16.msra.mxu0 0
    %1312 = vmatprep.subr.bf16.mxu0 0
    %1313 = vmatpush1.bf16.msra.mxu0 0
    %1314 = vmatprep.subr.bf16.mxu0 0
    %1315 = vmatpush1.bf16.msra.mxu0 0
    %1316 = vmatprep.subr.bf16.mxu0 0
    %1317 = vmatpush1.bf16.msra.mxu0 0
    %1318 = vmatprep.subr.bf16.mxu0 0
    %1319 = vmatpush1.bf16.msra.mxu0 0
    %1320 = vmatprep.subr.bf16.mxu0 0
    %1321 = vmatpush1.bf16.msra.mxu0 0
    %1322 = vmatprep.subr.bf16.mxu0 0
    %1323 = vmatpush1.bf16.msra.mxu0 0
    %1324 = vmatprep.subr.bf16.mxu0 0
    %1325 = vmatpush1.bf16.msra.mxu0 0
    %1326 = vmatprep.subr.bf16.mxu0 0
    %1327 = vmatpush1.bf16.msra.mxu0 0
    %1328 = vmatprep.subr.bf16.mxu0 0
    %1329 = vmatpush1.bf16.msra.mxu0 0
    %1330 = vmatprep.subr.bf16.mxu0 0
    %1331 = vmatpush1.bf16.msra.mxu0 0
    %1332 = vmatprep.mubr.bf16.mxu0 0
    %1333 = vmatmul.mubr.bf16.gmra.mrb[0].mxu0 %v1298
    %v1334 = vpop.f32.mrb[0].mxu0
    %v1335 = vadd.f32 0.0, %v1334
    %v1336 = vpop.f32.mrb[0].mxu0
    %v1337 = vadd.f32 0.0, %v1336
    %v1338 = vpop.f32.mrb[0].mxu0
    %v1339 = vpop.f32.mrb[0].mxu0
    %1340 = vdwg.mxu0
    %v1341 = vmul.f32 %v1335, 0.5
    %v1342 = vmul.f32 %v1337, 0.5
    %v1343 = vtanh.pop %v1341
    %v1344 = vtanh.pop %v1342
    %v1345 = vadd.f32 %v1343, 1.0
    %v1346 = vadd.f32 %v1344, 1.0
    %v1347 = vmul.f32 %v1345, 0.5
    %v1348 = vmul.f32 %v1346, 0.5
    %v1349 = vtanh.pop %v1337
    %v1350 = vmul.f32 %v1347, %v1211
    %1352 = vrot.lane.b32.xlu0 %v1349, 64
    %v1353 = vpop.permute.xlu0 %1352
    %v1355 = vmul.f32 %v1347, %v1353
    %1357 = vrot.lane.b32.xlu0 %v1355, 64
    %v1358 = vpop.permute.xlu0 %1357
    %v1360 = vadd.f32 %v1350, %v1358
    %v1361 = vtanh.pop %v1360
    %1363 = vrot.lane.b32.xlu0 %v1361, 64
    %v1364 = vpop.permute.xlu0 %1363
    %v1366 = vmul.f32 %v1348, %v1364
    %1368 = vrot.lane.b32.xlu0 %v1290, 64
    %v1369 = vpop.permute.xlu0 %1368
    %v1371 = vsel %vm111, %v1366, %v1369
    %v1372 = vpack.c.bf16 %v1371, %v1371
    %1373 = vmatprep.subr.bf16.mxu0 %v299
    %1374 = vmatpush1.bf16.msra.mxu0 %v298
    %1375 = vmatprep.subr.bf16.mxu0 %v301
    %1376 = vmatpush1.bf16.msra.mxu0 %v300
    %1377 = vmatprep.subr.bf16.mxu0 %v303
    %1378 = vmatpush1.bf16.msra.mxu0 %v302
    %1379 = vmatprep.subr.bf16.mxu0 %v305
    %1380 = vmatpush1.bf16.msra.mxu0 %v304
    %1381 = vmatprep.subr.bf16.mxu0 %v307
    %1382 = vmatpush1.bf16.msra.mxu0 %v306
    %1383 = vmatprep.subr.bf16.mxu0 %v309
    %1384 = vmatpush1.bf16.msra.mxu0 %v308
    %1385 = vmatprep.subr.bf16.mxu0 %v311
    %1386 = vmatpush1.bf16.msra.mxu0 %v310
    %1387 = vmatprep.subr.bf16.mxu0 %v313
    %1388 = vmatpush1.bf16.msra.mxu0 %v312
    %1389 = vmatprep.subr.bf16.mxu0 0
    %1390 = vmatpush1.bf16.msra.mxu0 0
    %1391 = vmatprep.subr.bf16.mxu0 0
    %1392 = vmatpush1.bf16.msra.mxu0 0
    %1393 = vmatprep.subr.bf16.mxu0 0
    %1394 = vmatpush1.bf16.msra.mxu0 0
    %1395 = vmatprep.subr.bf16.mxu0 0
    %1396 = vmatpush1.bf16.msra.mxu0 0
    %1397 = vmatprep.subr.bf16.mxu0 0
    %1398 = vmatpush1.bf16.msra.mxu0 0
    %1399 = vmatprep.subr.bf16.mxu0 0
    %1400 = vmatpush1.bf16.msra.mxu0 0
    %1401 = vmatprep.subr.bf16.mxu0 0
    %1402 = vmatpush1.bf16.msra.mxu0 0
    %1403 = vmatprep.subr.bf16.mxu0 0
    %1404 = vmatpush1.bf16.msra.mxu0 0
    %1405 = vmatprep.mubr.bf16.mxu0 0
    %1406 = vmatmul.mubr.bf16.gmra.mrb[0].mxu0 %v1372
    %v1407 = vpop.f32.mrb[0].mxu0
    %v1408 = vadd.f32 %v245, %v1407
    %v1409 = vpop.f32.mrb[0].mxu0
    %v1410 = vadd.f32 %v249, %v1409
    %v1411 = vpop.f32.mrb[0].mxu0
    %v1412 = vpop.f32.mrb[0].mxu0
    %1413 = vdwg.mxu0
    %v1414 = vmul.f32 %v1408, 0.5
    %v1415 = vmul.f32 %v1410, 0.5
    %v1416 = vtanh.pop %v1414
    %v1417 = vtanh.pop %v1415
    %v1418 = vadd.f32 %v1416, 1.0
    %v1419 = vadd.f32 %v1417, 1.0
    %v1420 = vmul.f32 %v1418, 0.5
    %v1421 = vmul.f32 %v1419, 0.5
    %v1422 = vtanh.pop %v1410
    %v1423 = vmul.f32 %v1420, %v1284
    %1425 = vrot.lane.b32.xlu0 %v1422, 64
    %v1426 = vpop.permute.xlu0 %1425
    %v1428 = vmul.f32 %v1420, %v1426
    %1430 = vrot.lane.b32.xlu0 %v1428, 64
    %v1431 = vpop.permute.xlu0 %1430
    %v1433 = vadd.f32 %v1423, %v1431
    %v1434 = vtanh.pop %v1433
    %1436 = vrot.lane.b32.xlu0 %v1434, 64
    %v1437 = vpop.permute.xlu0 %1436
    %v1439 = vmul.f32 %v1421, %v1437
    %1441 = vrot.lane.b32.xlu0 %v1439, 64
    %v1442 = vpop.permute.xlu0 %1441
    %v1444 = vsel %vm111, %v1366, %v1442
    %v1445 = vlaneseq
    %v1446 = vshrl.u32 %v1445, 7
    %v1447 = vsub.s32 1, %v1446
    %v1448 = vrot.slane %v107, %v1447
    %1450 = vrot.lane.b32.xlu0 %v1448, 7
    %v1451 = vpop.permute.xlu0 %1450
    %v1453 = vmul.f32 %v71, %v1451
    %v1454 = vlaneseq
    %v1455 = vshrl.u32 %v1454, 7
    %v1456 = vsub.s32 1, %v1455
    %v1457 = vrot.slane %v106, %v1456
    %v1458 = vmul.f32 %v1444, %v1457
    %1459 = vadd.xlane.f32.xlu0 %v1458
    %v1460 = vpop.xlane.xlu0 %1459
    %v1461 = vadd.f32 %v1453, %v1460
    %v1462 = vlaneseq
    %v1463 = vshrl.u32 %v1462, 7
    %v1464 = vsub.s32 2, %v1463
    %v1465 = vrot.slane %v106, %v1464
    %1467 = vrot.lane.b32.xlu0 %v1465, 7
    %v1468 = vpop.permute.xlu0 %1467
    %v1470 = vadd.f32 %v1461, %v1468
    %v1471 = vpack.c.bf16 %v1366, %v1366
    %v1472 = vpack.c.bf16 %v1470, %v1470
    %1474 = vrot.lane.b32.xlu0 %v1472, 57
    %v1475 = vpop.permute.xlu0 %1474
    %v1478 = vsel %vm111, %v1471, %v1475
    %v1479 = vsel %vm115, %v1478, 1065369472
    %v1480 = vsel %vm163, %v1479, 0
    %1482 = vmatprep.subr.bf16.mxu0 %v146
    %1483 = vmatpush1.bf16.msra.mxu0 %v145
    %1484 = vmatprep.subr.bf16.mxu0 %v148
    %1485 = vmatpush1.bf16.msra.mxu0 %v147
    %1486 = vmatprep.subr.bf16.mxu0 %v150
    %1487 = vmatpush1.bf16.msra.mxu0 %v149
    %1488 = vmatprep.subr.bf16.mxu0 %v152
    %1489 = vmatpush1.bf16.msra.mxu0 %v151
    %1490 = vmatprep.subr.bf16.mxu0 %v171
    %1491 = vmatpush1.bf16.msra.mxu0 %v168
    %1492 = vmatprep.subr.bf16.mxu0 0
    %1493 = vmatpush1.bf16.msra.mxu0 0
    %1494 = vmatprep.subr.bf16.mxu0 0
    %1495 = vmatpush1.bf16.msra.mxu0 0
    %1496 = vmatprep.subr.bf16.mxu0 0
    %1497 = vmatpush1.bf16.msra.mxu0 0
    %1498 = vmatprep.subr.bf16.mxu0 0
    %1499 = vmatpush1.bf16.msra.mxu0 0
    %1500 = vmatprep.subr.bf16.mxu0 0
    %1501 = vmatpush1.bf16.msra.mxu0 0
    %1502 = vmatprep.subr.bf16.mxu0 0
    %1503 = vmatpush1.bf16.msra.mxu0 0
    %1504 = vmatprep.subr.bf16.mxu0 0
    %1505 = vmatpush1.bf16.msra.mxu0 0
    %1506 = vmatprep.subr.bf16.mxu0 0
    %1507 = vmatpush1.bf16.msra.mxu0 0
    %1508 = vmatprep.subr.bf16.mxu0 0
    %1509 = vmatpush1.bf16.msra.mxu0 0
    %1510 = vmatprep.subr.bf16.mxu0 0
    %1511 = vmatpush1.bf16.msra.mxu0 0
    %1512 = vmatprep.subr.bf16.mxu0 0
    %1513 = vmatpush1.bf16.msra.mxu0 0
    %1514 = vmatprep.mubr.bf16.mxu0 0
    %1515 = vmatmul.mubr.bf16.gmra.mrb[0].mxu0 %v1480
    %v1516 = vpop.f32.mrb[0].mxu0
    %v1517 = vadd.f32 0.0, %v1516
    %v1518 = vpop.f32.mrb[0].mxu0
    %v1519 = vadd.f32 0.0, %v1518
    %v1520 = vpop.f32.mrb[0].mxu0
    %v1521 = vpop.f32.mrb[0].mxu0
    %1522 = vdwg.mxu0
    %v1523 = vmul.f32 %v1517, 0.5
    %v1524 = vmul.f32 %v1519, 0.5
    %v1525 = vtanh.pop %v1523
    %v1526 = vtanh.pop %v1524
    %v1527 = vadd.f32 %v1525, 1.0
    %v1528 = vadd.f32 %v1526, 1.0
    %v1529 = vmul.f32 %v1527, 0.5
    %v1530 = vmul.f32 %v1528, 0.5
    %v1531 = vtanh.pop %v1519
    %v1532 = vmul.f32 %v1529, %v1360
    %1534 = vrot.lane.b32.xlu0 %v1531, 64
    %v1535 = vpop.permute.xlu0 %1534
    %v1537 = vmul.f32 %v1529, %v1535
    %1539 = vrot.lane.b32.xlu0 %v1537, 64
    %v1540 = vpop.permute.xlu0 %1539
    %v1542 = vadd.f32 %v1532, %v1540
    %v1543 = vtanh.pop %v1542
    %1545 = vrot.lane.b32.xlu0 %v1543, 64
    %v1546 = vpop.permute.xlu0 %1545
    %v1548 = vmul.f32 %v1530, %v1546
    %v1549 = vsel %vm111, %v1548, %v1442
    %v1550 = vpack.c.bf16 %v1549, %v1549
    %1551 = vmatprep.subr.bf16.mxu0 %v299
    %1552 = vmatpush1.bf16.msra.mxu0 %v298
    %1553 = vmatprep.subr.bf16.mxu0 %v301
    %1554 = vmatpush1.bf16.msra.mxu0 %v300
    %1555 = vmatprep.subr.bf16.mxu0 %v303
    %1556 = vmatpush1.bf16.msra.mxu0 %v302
    %1557 = vmatprep.subr.bf16.mxu0 %v305
    %1558 = vmatpush1.bf16.msra.mxu0 %v304
    %1559 = vmatprep.subr.bf16.mxu0 %v307
    %1560 = vmatpush1.bf16.msra.mxu0 %v306
    %1561 = vmatprep.subr.bf16.mxu0 %v309
    %1562 = vmatpush1.bf16.msra.mxu0 %v308
    %1563 = vmatprep.subr.bf16.mxu0 %v311
    %1564 = vmatpush1.bf16.msra.mxu0 %v310
    %1565 = vmatprep.subr.bf16.mxu0 %v313
    %1566 = vmatpush1.bf16.msra.mxu0 %v312
    %1567 = vmatprep.subr.bf16.mxu0 0
    %1568 = vmatpush1.bf16.msra.mxu0 0
    %1569 = vmatprep.subr.bf16.mxu0 0
    %1570 = vmatpush1.bf16.msra.mxu0 0
    %1571 = vmatprep.subr.bf16.mxu0 0
    %1572 = vmatpush1.bf16.msra.mxu0 0
    %1573 = vmatprep.subr.bf16.mxu0 0
    %1574 = vmatpush1.bf16.msra.mxu0 0
    %1575 = vmatprep.subr.bf16.mxu0 0
    %1576 = vmatpush1.bf16.msra.mxu0 0
    %1577 = vmatprep.subr.bf16.mxu0 0
    %1578 = vmatpush1.bf16.msra.mxu0 0
    %1579 = vmatprep.subr.bf16.mxu0 0
    %1580 = vmatpush1.bf16.msra.mxu0 0
    %1581 = vmatprep.subr.bf16.mxu0 0
    %1582 = vmatpush1.bf16.msra.mxu0 0
    %1583 = vmatprep.mubr.bf16.mxu0 0
    %1584 = vmatmul.mubr.bf16.gmra.mrb[0].mxu0 %v1550
    %v1585 = vpop.f32.mrb[0].mxu0
    %v1586 = vadd.f32 %v245, %v1585
    %v1587 = vpop.f32.mrb[0].mxu0
    %v1588 = vadd.f32 %v249, %v1587
    %v1589 = vpop.f32.mrb[0].mxu0
    %v1590 = vpop.f32.mrb[0].mxu0
    %1591 = vdwg.mxu0
    %v1592 = vmul.f32 %v1586, 0.5
    %v1593 = vmul.f32 %v1588, 0.5
    %v1594 = vtanh.pop %v1592
    %v1595 = vtanh.pop %v1593
    %v1596 = vadd.f32 %v1594, 1.0
    %v1597 = vadd.f32 %v1595, 1.0
    %v1598 = vmul.f32 %v1596, 0.5
    %v1599 = vmul.f32 %v1597, 0.5
    %v1600 = vtanh.pop %v1588
    %v1601 = vmul.f32 %v1598, %v1433
    %1603 = vrot.lane.b32.xlu0 %v1600, 64
    %v1604 = vpop.permute.xlu0 %1603
    %v1606 = vmul.f32 %v1598, %v1604
    %1608 = vrot.lane.b32.xlu0 %v1606, 64
    %v1609 = vpop.permute.xlu0 %1608
    %v1611 = vadd.f32 %v1601, %v1609
    %v1612 = vtanh.pop %v1611
    %1614 = vrot.lane.b32.xlu0 %v1612, 64
    %v1615 = vpop.permute.xlu0 %1614
    %v1617 = vmul.f32 %v1599, %v1615
    %1619 = vrot.lane.b32.xlu0 %v1617, 64
    %v1620 = vpop.permute.xlu0 %1619
    %v1622 = vsel %vm111, %v1548, %v1620
    %v1623 = vmul.f32 %v1470, %v1451
    %v1624 = vmul.f32 %v1622, %v1457
    %1625 = vadd.xlane.f32.xlu0 %v1624
    %v1626 = vpop.xlane.xlu0 %1625
    %v1627 = vadd.f32 %v1623, %v1626
    %v1628 = vadd.f32 %v1627, %v1468
    %v1629 = vlaneseq
    %v1630 = vshrl.u32 %v1629, 7
    %v1631 = vsub.s32 3, %v1630
    %v1632 = vrot.slane %v106, %v1631
    %v1635 = vunpack.c.l.b16 %v98
    %v1636 = vunpack.c.l.b16 %v99
    %v1637 = vpack.c.b16 %v1636, %v1635
    %vm1638 = vcmask 72704
    %v1640 = vsel %vm1638, %v72, 0
    %vm1642 = vcmask 1043456
    %vm1643 = vcmask 1044480
    %v1644 = vsel %vm1642, 4294967295, 65535
    %v1645 = vsel %vm1643, %v1644, 0
    %v1647 = vand.u32 %v1637, %v1645
    %1649 = vmatprep.subr.bf16.mxu0 0
    %1650 = vmatpush1.bf16.msra.mxu0 %v1647
    %1651 = vmatprep.subr.bf16.mxu0 0
    %1652 = vmatpush1.bf16.msra.mxu0 0
    %1653 = vmatprep.subr.bf16.mxu0 0
    %1654 = vmatpush1.bf16.msra.mxu0 0
    %1655 = vmatprep.subr.bf16.mxu0 0
    %1656 = vmatpush1.bf16.msra.mxu0 0
    %1657 = vmatprep.subr.bf16.mxu0 0
    %1658 = vmatpush1.bf16.msra.mxu0 0
    %1659 = vmatprep.subr.bf16.mxu0 0
    %1660 = vmatpush1.bf16.msra.mxu0 0
    %1661 = vmatprep.subr.bf16.mxu0 0
    %1662 = vmatpush1.bf16.msra.mxu0 0
    %1663 = vmatprep.subr.bf16.mxu0 0
    %1664 = vmatpush1.bf16.msra.mxu0 0
    %1665 = vmatprep.subr.bf16.mxu0 0
    %1666 = vmatpush1.bf16.msra.mxu0 0
    %1667 = vmatprep.subr.bf16.mxu0 0
    %1668 = vmatpush1.bf16.msra.mxu0 0
    %1669 = vmatprep.subr.bf16.mxu0 0
    %1670 = vmatpush1.bf16.msra.mxu0 0
    %1671 = vmatprep.subr.bf16.mxu0 0
    %1672 = vmatpush1.bf16.msra.mxu0 0
    %1673 = vmatprep.subr.bf16.mxu0 0
    %1674 = vmatpush1.bf16.msra.mxu0 0
    %1675 = vmatprep.subr.bf16.mxu0 0
    %1676 = vmatpush1.bf16.msra.mxu0 0
    %1677 = vmatprep.subr.bf16.mxu0 0
    %1678 = vmatpush1.bf16.msra.mxu0 0
    %1679 = vmatprep.subr.bf16.mxu0 0
    %1680 = vmatpush1.bf16.msra.mxu0 0
    %1681 = vmatprep.mubr.bf16.mxu0 0
    %1682 = vmatmul.mubr.bf16.gmra.mrb[0].mxu0 %v1640
    %v1683 = vpop.f32.mrb[0].mxu0
    %v1684 = vadd.f32 %v1632, %v1683
    %v1685 = vpop.f32.mrb[0].mxu0
    %v1686 = vpop.f32.mrb[0].mxu0
    %v1687 = vpop.f32.mrb[0].mxu0
    %1688 = vdwg.mxu0
    %v1689 = vmax.f32 %v1684, 0.0
    %v1690 = vpack.c.bf16 %v1689, %v1689
    %v1691 = vlaneseq
    %v1692 = vshrl.u32 %v1691, 7
    %v1693 = vsub.s32 4, %v1692
    %v1694 = vrot.slane %v106, %v1693
    %v1701 = vunpack.c.l.b16 %v100
    %v1702 = vunpack.c.l.b16 %v101
    %v1703 = vunpack.c.l.b16 %v102
    %v1704 = vunpack.c.l.b16 %v103
    %v1705 = vunpack.c.l.b16 %v104
    %v1706 = vunpack.c.l.b16 %v105
    %v1707 = vpack.c.b16 %v1702, %v1701
    %v1708 = vpack.c.b16 %v1704, %v1703
    %v1709 = vpack.c.b16 %v1706, %v1705
    %1710 = vrot.lane.b32.xlu0 %v1637, 64
    %v1711 = vpop.permute.xlu0 %1710
    %1712 = vrot.lane.b32.xlu0 %v1707, 64
    %v1713 = vpop.permute.xlu0 %1712
    %1714 = vrot.lane.b32.xlu0 %v1708, 64
    %v1715 = vpop.permute.xlu0 %1714
    %1716 = vrot.lane.b32.xlu0 %v1709, 64
    %v1717 = vpop.permute.xlu0 %1716
    %v1723 = vsel %vm111, %v1690, 0
    %1725 = vmatprep.subr.bf16.mxu0 0
    %1726 = vmatpush1.bf16.msra.mxu0 %v1711
    %1727 = vmatprep.subr.bf16.mxu0 0
    %1728 = vmatpush1.bf16.msra.mxu0 %v1713
    %1729 = vmatprep.subr.bf16.mxu0 0
    %1730 = vmatpush1.bf16.msra.mxu0 %v1715
    %1731 = vmatprep.subr.bf16.mxu0 0
    %1732 = vmatpush1.bf16.msra.mxu0 %v1717
    %1733 = vmatprep.subr.bf16.mxu0 0
    %1734 = vmatpush1.bf16.msra.mxu0 0
    %1735 = vmatprep.subr.bf16.mxu0 0
    %1736 = vmatpush1.bf16.msra.mxu0 0
    %1737 = vmatprep.subr.bf16.mxu0 0
    %1738 = vmatpush1.bf16.msra.mxu0 0
    %1739 = vmatprep.subr.bf16.mxu0 0
    %1740 = vmatpush1.bf16.msra.mxu0 0
    %1741 = vmatprep.subr.bf16.mxu0 0
    %1742 = vmatpush1.bf16.msra.mxu0 0
    %1743 = vmatprep.subr.bf16.mxu0 0
    %1744 = vmatpush1.bf16.msra.mxu0 0
    %1745 = vmatprep.subr.bf16.mxu0 0
    %1746 = vmatpush1.bf16.msra.mxu0 0
    %1747 = vmatprep.subr.bf16.mxu0 0
    %1748 = vmatpush1.bf16.msra.mxu0 0
    %1749 = vmatprep.subr.bf16.mxu0 0
    %1750 = vmatpush1.bf16.msra.mxu0 0
    %1751 = vmatprep.subr.bf16.mxu0 0
    %1752 = vmatpush1.bf16.msra.mxu0 0
    %1753 = vmatprep.subr.bf16.mxu0 0
    %1754 = vmatpush1.bf16.msra.mxu0 0
    %1755 = vmatprep.subr.bf16.mxu0 0
    %1756 = vmatpush1.bf16.msra.mxu0 0
    %1757 = vmatprep.mubr.bf16.mxu0 0
    %1758 = vmatmul.mubr.bf16.gmra.mrb[0].mxu0 %v1723
    %v1759 = vpop.f32.mrb[0].mxu0
    %v1760 = vadd.f32 %v1694, %v1759
    %v1761 = vpop.f32.mrb[0].mxu0
    %v1762 = vpop.f32.mrb[0].mxu0
    %v1763 = vpop.f32.mrb[0].mxu0
    %1764 = vdwg.mxu0
    %v1765 = vmax.f32 %v1760, 0.0
    %1767 = vset.pattern.permute.xlu0 7
    %1768 = vperm.xlu0 %1767, %v1628
    %v1769 = vpop.permute.xlu0 %1768
    %v1771 = vsel %vm111, %v1765, %v1769
    %1772 = vxpose.xlu0.b32.start [1/16] %v1771, 128
    %1773 = vxpose.xlu0.b32.cont [2/16] 0.0, 128
    %1774 = vxpose.xlu0.b32.cont [3/16] 0.0, 128
    %1775 = vxpose.xlu0.b32.cont [4/16] 0.0, 128
    %1776 = vxpose.xlu0.b32.cont [5/16] 0.0, 128
    %1777 = vxpose.xlu0.b32.cont [6/16] 0.0, 128
    %1778 = vxpose.xlu0.b32.cont [7/16] 0.0, 128
    %1779 = vxpose.xlu0.b32.cont [8/16] 0.0, 128
    %1780 = vxpose.xlu0.b32.cont [9/16] 0.0, 128
    %1781 = vxpose.xlu0.b32.cont [10/16] 0.0, 128
    %1782 = vxpose.xlu0.b32.cont [11/16] 0.0, 128
    %1783 = vxpose.xlu0.b32.cont [12/16] 0.0, 128
    %1784 = vxpose.xlu0.b32.cont [13/16] 0.0, 128
    %1785 = vxpose.xlu0.b32.cont [14/16] 0.0, 128
    %1786 = vxpose.xlu0.b32.cont [15/16] 0.0, 128
    %1787 = vxpose.xlu0.b32.end [16/16] 0.0, 128
    %v1788 = vpop.trf.xlu0
    %v1789 = vpop.trf.xlu0
    %v1790 = vpop.trf.xlu0
    %v1791 = vpop.trf.xlu0
    %v1792 = vpop.trf.xlu0
    %v1793 = vpop.trf.xlu0
    %v1794 = vpop.trf.xlu0
    %v1795 = vpop.trf.xlu0
    %v1796 = vpop.trf.xlu0
    %v1797 = vpop.trf.xlu0
    %v1798 = vpop.trf.xlu0
    %v1799 = vpop.trf.xlu0
    %v1800 = vpop.trf.xlu0
    %v1801 = vpop.trf.xlu0
    %v1802 = vpop.trf.xlu0
    %v1803 = vpop.trf.xlu0
    %1805 = vset.pattern.permute.xlu0 1
    %1806 = vperm.xlu0 %1805, %v106
    %v1807 = vpop.permute.xlu0 %1806
    %v1808 = vrot.slane %v106, 5
    %v1809 = vrot.slane %v1807, 2
    %v1811 = vsel %vm111, %v1808, 0
    %1813 = vmatprep.subr.mxu0 0.0
    %1814 = vmatpush1.msra.mxu0 %v1788
    %1815 = vmatprep.subr.mxu0 0.0
    %1816 = vmatpush1.msra.mxu0 %v1789
    %1817 = vmatprep.subr.mxu0 0.0
    %1818 = vmatpush1.msra.mxu0 %v1790
    %1819 = vmatprep.subr.mxu0 0.0
    %1820 = vmatpush1.msra.mxu0 %v1791
    %1821 = vmatprep.subr.mxu0 0.0
    %1822 = vmatpush1.msra.mxu0 %v1792
    %1823 = vmatprep.subr.mxu0 0.0
    %1824 = vmatpush1.msra.mxu0 %v1793
    %1825 = vmatprep.subr.mxu0 0.0
    %1826 = vmatpush1.msra.mxu0 %v1794
    %1827 = vmatprep.subr.mxu0 0.0
    %1828 = vmatpush1.msra.mxu0 %v1795
    %1829 = vmatprep.subr.mxu0 0.0
    %1830 = vmatpush1.msra.mxu0 0.0
    %1831 = vmatprep.subr.mxu0 0.0
    %1832 = vmatpush1.msra.mxu0 0.0
    %1833 = vmatprep.subr.mxu0 0.0
    %1834 = vmatpush1.msra.mxu0 0.0
    %1835 = vmatprep.subr.mxu0 0.0
    %1836 = vmatpush1.msra.mxu0 0.0
    %1837 = vmatprep.subr.mxu0 0.0
    %1838 = vmatpush1.msra.mxu0 0.0
    %1839 = vmatprep.subr.mxu0 0.0
    %1840 = vmatpush1.msra.mxu0 0.0
    %1841 = vmatprep.subr.mxu0 0.0
    %1842 = vmatpush1.msra.mxu0 0.0
    %1843 = vmatprep.subr.mxu0 0.0
    %1844 = vmatpush1.msra.mxu0 0.0
    %1845 = vmatprep.subr.mxu0 0.0
    %1846 = vmatpush1.msra.mxu0 0.0
    %1847 = vmatprep.subr.mxu0 0.0
    %1848 = vmatpush1.msra.mxu0 0.0
    %1849 = vmatprep.subr.mxu0 0.0
    %1850 = vmatpush1.msra.mxu0 0.0
    %1851 = vmatprep.subr.mxu0 0.0
    %1852 = vmatpush1.msra.mxu0 0.0
    %1853 = vmatprep.subr.mxu0 0.0
    %1854 = vmatpush1.msra.mxu0 0.0
    %1855 = vmatprep.subr.mxu0 0.0
    %1856 = vmatpush1.msra.mxu0 0.0
    %1857 = vmatprep.subr.mxu0 0.0
    %1858 = vmatpush1.msra.mxu0 0.0
    %1859 = vmatprep.subr.mxu0 0.0
    %1860 = vmatpush1.msra.mxu0 0.0
    %1861 = vmatprep.subr.mxu0 0.0
    %1862 = vmatpush1.msra.mxu0 0.0
    %1863 = vmatprep.subr.mxu0 0.0
    %1864 = vmatpush1.msra.mxu0 0.0
    %1865 = vmatprep.subr.mxu0 0.0
    %1866 = vmatpush1.msra.mxu0 0.0
    %1867 = vmatprep.subr.mxu0 0.0
    %1868 = vmatpush1.msra.mxu0 0.0
    %1869 = vmatprep.subr.mxu0 0.0
    %1870 = vmatpush1.msra.mxu0 0.0
    %1871 = vmatprep.subr.mxu0 0.0
    %1872 = vmatpush1.msra.mxu0 0.0
    %1873 = vmatprep.subr.mxu0 0.0
    %1874 = vmatpush1.msra.mxu0 0.0
    %1875 = vmatprep.subr.mxu0 0.0
    %1876 = vmatpush1.msra.mxu0 0.0
    %1877 = vmatprep.mubr.f32.mxu0 0.0
    %1878 = vmatmul.mubr.f32.gmra.mrb[0].mxu0 %v1811
    %v1879 = vpop.f32.mrb[0].mxu0
    %v1880 = vadd.f32 %v1809, %v1879
    %v1881 = vpop.f32.mrb[0].mxu0
    %1882 = vdwg.mxu0
    %v1883 = vmul.f32 %v1880, 0.5
    %v1884 = vtanh.pop %v1883
    %v1885 = vadd.f32 %v1884, 1.0
    %v1886 = vmul.f32 %v1885, 0.5
    %v1887 = vmul.f32 %v1796, %v1886
    %vm1888 = vcmask 57344
    %1889 = vst.msk [vmem:[#allocation10] sm:$0x1] %vm1888, %v1887
    // Predicated region
    $region34: #{gate_sequence_forward.1} parent=1 // pred_check
      _
    $region35: #{gate_sequence_forward.1} parent=1 // pred_check_branch
      %1891 = sbr.rel (0) target = $region37
    $region36: #{gate_sequence_forward.1} parent=1 // pred_region
      %s1893 = ssub.s32 16, 16
      %1894 = vsyncadd [#allocation4], %s1893
      %s1896 = sshll.u32 [#allocation10], 4
      %s1897 = int_to_ptr.vmem [resolvable:$true] %s1896
      %1899 = dma.vmem_to_hbm [thread:$0]  %s1897, 16, %s4, [#allocation4]
    $region37: #{gate_sequence_forward.1} parent=1 // pred_fallthru
      _
    // Predicated region
    $region38: #{gate_sequence_forward.1} parent=1 // pred_check
      _
    $region39: #{gate_sequence_forward.1} parent=1 // pred_check_branch
      %1901 = sbr.rel (0) target = $region41
    $region40: #{gate_sequence_forward.1} parent=1 // pred_region
      %1902 = dma.done [#allocation4], 16
    $region41: #{gate_sequence_forward.1} parent=1 // pred_fallthru
      _
    %1903 = vsyncpa [#allocation3], 1
    %1904 = vsyncpa [#allocation6], 1
    %1905 = vsyncpa [#allocation9], 1
    %1906 = vsyncpa [#allocation4], 1

</llo_original>
